<compile_context>
chip_gen: v5e
topology: v5e:2x2
jax: 0.10.0
libtpu: 0.0.40
codegen_flags: <defaults>
</compile_context>

<pallas_src>
import jax
import jax.numpy as jnp
from jax.experimental import pallas as pl
from jax.experimental.pallas import tpu as pltpu

INPUT_DIM = 25
LAYERS_CONFIG = [256, 512, 128, 64]
EMB = LAYERS_CONFIG[-1]


def _round_up(x, m):
    return ((x + m - 1) // m) * m


def siamese_kernel(x1_ref, x2_ref,
                   w1, b1, w2, b2, w3, b3, w4, b4,
                   wl1, bl1, wl2_row, bl2,
                   out_ref):
    """One batch tile of the full siamese forward pass, entirely in VMEM.

    x1_ref/x2_ref: (tile, Dp) bf16. Tower/head weights are bf16, biases f32.
    """
    tile = x1_ref.shape[0]
    # Stack the two siamese inputs along the batch axis: one MXU pass with
    # 2*tile rows instead of pushing the same weights through the MXU twice.
    x = jnp.concatenate([x1_ref[...], x2_ref[...]], axis=0)   # (2*tile, Dp) bf16

    def dense(h, w_ref, b_ref, relu):
        y = jnp.dot(h, w_ref[...], preferred_element_type=jnp.float32) + b_ref[...]
        if relu:
            y = jnp.maximum(y, 0.0)
        return y

    h = dense(x, w1, b1, True).astype(jnp.bfloat16)
    h = dense(h, w2, b2, True).astype(jnp.bfloat16)
    h = dense(h, w3, b3, True).astype(jnp.bfloat16)
    e = dense(h, w4, b4, False)                               # (2*tile, EMB) f32

    diff = (e[:tile, :] - e[tile:, :]).astype(jnp.bfloat16)   # (tile, EMB)
    hidden = jnp.maximum(
        jnp.dot(diff, wl1[...], preferred_element_type=jnp.float32) + bl1[...],
        0.0)                                                  # (tile, EMB) f32

    # Final [tile,EMB] x [EMB,1] matmul replaced by VPU multiply + lane reduce:
    # avoids a full MXU fill/drain for a 1-column result.
    dist = jnp.sum(hidden * wl2_row[...], axis=-1, keepdims=True) + bl2[...]
    out_ref[...] = dist.astype(out_ref.dtype)


def siamese_forward(x1, x2, params, *, batch_tile=None):
    B, D = x1.shape
    assert x2.shape == (B, D)
    (w1, b1), (w2, b2), (w3, b3), (w4, b4), (wl1, bl1), (wl2, bl2) = params

    if batch_tile is None:
        # One grid step for small batches; otherwise <=256-row tiles (full MXU
        # height on v6e/v7x) over a "parallel" batch grid (v7x dual-TC).
        batch_tile = min(_round_up(B, 16), 256)
    batch_tile = _round_up(batch_tile, 16)
    Bp = _round_up(B, batch_tile)                 # padded batch (handles ragged B)
    Dp = _round_up(max(D, 128), 128)              # pad K=25 -> 128 for clean tiles

    def pad2(a, rows, cols):
        return jnp.pad(a, ((0, rows - a.shape[0]), (0, cols - a.shape[1])))

    # bf16 matmul operands (f32 accumulation happens inside the kernel).
    x1p = pad2(x1, Bp, Dp).astype(jnp.bfloat16)
    x2p = pad2(x2, Bp, Dp).astype(jnp.bfloat16)
    w1p = pad2(w1, Dp, w1.shape[1]).astype(jnp.bfloat16)      # zero rows: no-op
    w2b, w3b, w4b, wl1b = (w.astype(jnp.bfloat16) for w in (w2, w3, w4, wl1))
    wl2_row = wl2.T.astype(jnp.float32)                       # (1, EMB), VPU path
    b1f, b2f, b3f, b4f, bl1f, bl2f = (b.astype(jnp.float32)
                                      for b in (b1, b2, b3, b4, bl1, bl2))

    grid = (Bp // batch_tile,)

    def x_spec():
        return pl.BlockSpec((batch_tile, Dp), lambda i: (i, 0))

    def full_spec(a):
        # weights / biases: replicated (constant block index) across the grid.
        return pl.BlockSpec(a.shape, lambda i: (0,) * a.ndim)

    weight_args = [w1p, b1f, w2b, b2f, w3b, b3f, w4b, b4f,
                   wl1b, bl1f, wl2_row, bl2f]

    out = pl.pallas_call(
        siamese_kernel,
        out_shape=jax.ShapeDtypeStruct((Bp, 1), jnp.float32),
        grid_spec=pltpu.PrefetchScalarGridSpec(
            num_scalar_prefetch=0,
            grid=grid,
            in_specs=[x_spec(), x_spec()] + [full_spec(a) for a in weight_args],
            out_specs=pl.BlockSpec((batch_tile, 1), lambda i: (i, 0)),
        ),
        compiler_params=pltpu.CompilerParams(
            dimension_semantics=("parallel",)),
    )(x1p, x2p, *weight_args)
    return out[:B]


def init_params(key):
    """Deterministic synthetic parameters matching the PyTorch module's shapes.
    Linear weights stored as [in, out] (transpose of torch layout)."""
    dims = [INPUT_DIM] + LAYERS_CONFIG          # shared tower: 25->256->512->128->64
    head_dims = [(EMB, EMB), (EMB, 1)]          # linear_layer_1, linear_layer_2
    params = []
    for (din, dout) in list(zip(dims[:-1], dims[1:])) + head_dims:
        key, kw, kb = jax.random.split(key, 3)
        bound = 1.0 / jnp.sqrt(din)
        w = jax.random.uniform(kw, (din, dout), jnp.float32, -bound, bound)
        b = jax.random.uniform(kb, (1, dout), jnp.float32, -bound, bound)
        params.append((w, b))
    return params


def reference_forward_f32(x1, x2, params):
    """Pure-JAX full-f32 reference (module semantics)."""
    (w1, b1), (w2, b2), (w3, b3), (w4, b4), (wl1, bl1), (wl2, bl2) = params

    def tower(x):
        h = jnp.maximum(x @ w1 + b1, 0.0)
        h = jnp.maximum(h @ w2 + b2, 0.0)
        h = jnp.maximum(h @ w3 + b3, 0.0)
        return h @ w4 + b4

    d = tower(x1) - tower(x2)
    h = jnp.maximum(d @ wl1 + bl1, 0.0)
    return h @ wl2 + bl2


def reference_forward_matched(x1, x2, params):
    """Pure-JAX reference matching the kernel's mixed precision
    (bf16 matmul inputs, f32 accumulation / bias / ReLU)."""
    (w1, b1), (w2, b2), (w3, b3), (w4, b4), (wl1, bl1), (wl2, bl2) = params
    bf = jnp.bfloat16

    def dense(h, w, b, relu):
        y = jnp.dot(h.astype(bf), w.astype(bf),
                    preferred_element_type=jnp.float32) + b
        return jnp.maximum(y, 0.0) if relu else y

    def tower(x):
        h = dense(x, w1, b1, True)
        h = dense(h, w2, b2, True)
        h = dense(h, w3, b3, True)
        return dense(h, w4, b4, False)

    d = tower(x1) - tower(x2)
    h = dense(d, wl1, bl1, True)
    return jnp.sum(h * wl2.T, axis=-1, keepdims=True) + bl2


if __name__ == "__main__":
    key = jax.random.PRNGKey(0)
    kp, k1, k2 = jax.random.split(key, 3)
    params = init_params(kp)

    B = 64  # matches train_params['batch_size']
    x1 = jax.random.normal(k1, (B, INPUT_DIM), jnp.float32)
    x2 = jax.random.normal(k2, (B, INPUT_DIM), jnp.float32)

    out = siamese_forward(x1, x2, params)
    out = jax.block_until_ready(out)
    assert out.shape == (B, 1)

    ref_matched = reference_forward_matched(x1, x2, params)
    ref_f32 = reference_forward_f32(x1, x2, params)
    assert jnp.allclose(out, ref_matched, atol=1e-2, rtol=1e-2), \
        "mismatch vs matched-precision reference"
    assert jnp.allclose(out, ref_f32, atol=5e-2, rtol=5e-2), \
        "mismatch vs f32 reference"

    print("KERNEL_OK")
</pallas_src>

<mosaic_0001>
module attributes {stable_mosaic.version = 11 : i64} {
  func.func @siamese_kernel(%arg0: i32, %arg1: memref<64x128xbf16, #tpu.memory_space<vmem>>, %arg2: memref<64x128xbf16, #tpu.memory_space<vmem>>, %arg3: memref<128x256xbf16, #tpu.memory_space<vmem>>, %arg4: memref<1x256xf32, #tpu.memory_space<vmem>>, %arg5: memref<256x512xbf16, #tpu.memory_space<vmem>>, %arg6: memref<1x512xf32, #tpu.memory_space<vmem>>, %arg7: memref<512x128xbf16, #tpu.memory_space<vmem>>, %arg8: memref<1x128xf32, #tpu.memory_space<vmem>>, %arg9: memref<128x64xbf16, #tpu.memory_space<vmem>>, %arg10: memref<1x64xf32, #tpu.memory_space<vmem>>, %arg11: memref<64x64xbf16, #tpu.memory_space<vmem>>, %arg12: memref<1x64xf32, #tpu.memory_space<vmem>>, %arg13: memref<1x64xf32, #tpu.memory_space<vmem>>, %arg14: memref<1x1xf32, #tpu.memory_space<vmem>>, %arg15: memref<64x1xf32, #tpu.memory_space<vmem>>) attributes {dimension_semantics = [#tpu.dimension_semantics<parallel>], iteration_bounds = array<i64: 1>, scalar_prefetch = 0 : i64, scratch_operands = 0 : i64, tpu.core_type = #tpu.core_type<tc>, window_params = [{transform_indices = @transform_0, window_bounds = array<i64: 64, 128>}, {transform_indices = @transform_1, window_bounds = array<i64: 64, 128>}, {pipeline_mode = #tpu.pipeline_mode<synchronous>, transform_indices = @transform_2, window_bounds = array<i64: 128, 256>}, {pipeline_mode = #tpu.pipeline_mode<synchronous>, transform_indices = @transform_3, window_bounds = array<i64: 1, 256>}, {pipeline_mode = #tpu.pipeline_mode<synchronous>, transform_indices = @transform_4, window_bounds = array<i64: 256, 512>}, {pipeline_mode = #tpu.pipeline_mode<synchronous>, transform_indices = @transform_5, window_bounds = array<i64: 1, 512>}, {pipeline_mode = #tpu.pipeline_mode<synchronous>, transform_indices = @transform_6, window_bounds = array<i64: 512, 128>}, {pipeline_mode = #tpu.pipeline_mode<synchronous>, transform_indices = @transform_7, window_bounds = array<i64: 1, 128>}, {pipeline_mode = #tpu.pipeline_mode<synchronous>, transform_indices = @transform_8, window_bounds = array<i64: 128, 64>}, {pipeline_mode = #tpu.pipeline_mode<synchronous>, transform_indices = @transform_9, window_bounds = array<i64: 1, 64>}, {pipeline_mode = #tpu.pipeline_mode<synchronous>, transform_indices = @transform_10, window_bounds = array<i64: 64, 64>}, {pipeline_mode = #tpu.pipeline_mode<synchronous>, transform_indices = @transform_11, window_bounds = array<i64: 1, 64>}, {pipeline_mode = #tpu.pipeline_mode<synchronous>, transform_indices = @transform_12, window_bounds = array<i64: 1, 64>}, {pipeline_mode = #tpu.pipeline_mode<synchronous>, transform_indices = @transform_13, window_bounds = array<i64: 1, 1>}, {transform_indices = @transform_14, window_bounds = array<i64: 64, 1>}]} {
    %c0 = arith.constant 0 : index
    %c0_0 = arith.constant 0 : index
    %0 = vector.load %arg1[%c0, %c0_0] : memref<64x128xbf16, #tpu.memory_space<vmem>>, vector<64x128xbf16>
    %c0_1 = arith.constant 0 : index
    %c0_2 = arith.constant 0 : index
    %1 = vector.load %arg2[%c0_1, %c0_2] : memref<64x128xbf16, #tpu.memory_space<vmem>>, vector<64x128xbf16>
    %2 = tpu.concatenate %0, %1 in 0 : vector<64x128xbf16>, vector<64x128xbf16> -> vector<128x128xbf16>
    %c0_3 = arith.constant 0 : index
    %c0_4 = arith.constant 0 : index
    %3 = vector.load %arg3[%c0_3, %c0_4] : memref<128x256xbf16, #tpu.memory_space<vmem>>, vector<128x256xbf16>
    %cst = arith.constant dense<0.000000e+00> : vector<128x256xf32>
    %4 = tpu.matmul %2, %3, %cst {dimension_numbers = #tpu.dot_dimension_numbers<[1], [0], [0], [1], [0, 0, 1, 1], [], []>} : vector<128x128xbf16>, vector<128x256xbf16>, vector<128x256xf32> -> vector<128x256xf32>
    %c0_5 = arith.constant 0 : index
    %c0_6 = arith.constant 0 : index
    %5 = vector.load %arg4[%c0_5, %c0_6] : memref<1x256xf32, #tpu.memory_space<vmem>>, vector<1x256xf32>
    %6 = vector.broadcast %5 : vector<1x256xf32> to vector<128x256xf32>
    %7 = arith.addf %4, %6 : vector<128x256xf32>
    %cst_7 = arith.constant 0.000000e+00 : f32
    %8 = vector.broadcast %cst_7 : f32 to vector<128x256xf32>
    %9 = arith.maximumf %7, %8 : vector<128x256xf32>
    %10 = arith.truncf %9 : vector<128x256xf32> to vector<128x256xbf16>
    %c0_8 = arith.constant 0 : index
    %c0_9 = arith.constant 0 : index
    %11 = vector.load %arg5[%c0_8, %c0_9] : memref<256x512xbf16, #tpu.memory_space<vmem>>, vector<256x512xbf16>
    %cst_10 = arith.constant dense<0.000000e+00> : vector<128x512xf32>
    %12 = tpu.matmul %10, %11, %cst_10 {dimension_numbers = #tpu.dot_dimension_numbers<[1], [0], [0], [1], [0, 0, 1, 1], [], []>} : vector<128x256xbf16>, vector<256x512xbf16>, vector<128x512xf32> -> vector<128x512xf32>
    %c0_11 = arith.constant 0 : index
    %c0_12 = arith.constant 0 : index
    %13 = vector.load %arg6[%c0_11, %c0_12] : memref<1x512xf32, #tpu.memory_space<vmem>>, vector<1x512xf32>
    %14 = vector.broadcast %13 : vector<1x512xf32> to vector<128x512xf32>
    %15 = arith.addf %12, %14 : vector<128x512xf32>
    %cst_13 = arith.constant 0.000000e+00 : f32
    %16 = vector.broadcast %cst_13 : f32 to vector<128x512xf32>
    %17 = arith.maximumf %15, %16 : vector<128x512xf32>
    %18 = arith.truncf %17 : vector<128x512xf32> to vector<128x512xbf16>
    %c0_14 = arith.constant 0 : index
    %c0_15 = arith.constant 0 : index
    %19 = vector.load %arg7[%c0_14, %c0_15] : memref<512x128xbf16, #tpu.memory_space<vmem>>, vector<512x128xbf16>
    %cst_16 = arith.constant dense<0.000000e+00> : vector<128x128xf32>
    %20 = tpu.matmul %18, %19, %cst_16 {dimension_numbers = #tpu.dot_dimension_numbers<[1], [0], [0], [1], [0, 0, 1, 1], [], []>} : vector<128x512xbf16>, vector<512x128xbf16>, vector<128x128xf32> -> vector<128x128xf32>
    %c0_17 = arith.constant 0 : index
    %c0_18 = arith.constant 0 : index
    %21 = vector.load %arg8[%c0_17, %c0_18] : memref<1x128xf32, #tpu.memory_space<vmem>>, vector<1x128xf32>
    %22 = vector.broadcast %21 : vector<1x128xf32> to vector<128x128xf32>
    %23 = arith.addf %20, %22 : vector<128x128xf32>
    %cst_19 = arith.constant 0.000000e+00 : f32
    %24 = vector.broadcast %cst_19 : f32 to vector<128x128xf32>
    %25 = arith.maximumf %23, %24 : vector<128x128xf32>
    %26 = arith.truncf %25 : vector<128x128xf32> to vector<128x128xbf16>
    %c0_20 = arith.constant 0 : index
    %c0_21 = arith.constant 0 : index
    %27 = vector.load %arg9[%c0_20, %c0_21] : memref<128x64xbf16, #tpu.memory_space<vmem>>, vector<128x64xbf16>
    %cst_22 = arith.constant dense<0.000000e+00> : vector<128x64xf32>
    %28 = tpu.matmul %26, %27, %cst_22 {dimension_numbers = #tpu.dot_dimension_numbers<[1], [0], [0], [1], [0, 0, 1, 1], [], []>} : vector<128x128xbf16>, vector<128x64xbf16>, vector<128x64xf32> -> vector<128x64xf32>
    %c0_23 = arith.constant 0 : index
    %c0_24 = arith.constant 0 : index
    %29 = vector.load %arg10[%c0_23, %c0_24] : memref<1x64xf32, #tpu.memory_space<vmem>>, vector<1x64xf32>
    %30 = vector.broadcast %29 : vector<1x64xf32> to vector<128x64xf32>
    %31 = arith.addf %28, %30 : vector<128x64xf32>
    %32 = vector.extract_strided_slice %31 {offsets = [0, 0], sizes = [64, 64], strides = [1, 1]} : vector<128x64xf32> to vector<64x64xf32>
    %33 = vector.extract_strided_slice %31 {offsets = [64, 0], sizes = [64, 64], strides = [1, 1]} : vector<128x64xf32> to vector<64x64xf32>
    %34 = arith.subf %32, %33 : vector<64x64xf32>
    %35 = arith.truncf %34 : vector<64x64xf32> to vector<64x64xbf16>
    %c0_25 = arith.constant 0 : index
    %c0_26 = arith.constant 0 : index
    %36 = vector.load %arg11[%c0_25, %c0_26] : memref<64x64xbf16, #tpu.memory_space<vmem>>, vector<64x64xbf16>
    %cst_27 = arith.constant dense<0.000000e+00> : vector<64x64xf32>
    %37 = tpu.matmul %35, %36, %cst_27 {dimension_numbers = #tpu.dot_dimension_numbers<[1], [0], [0], [1], [0, 0, 1, 1], [], []>} : vector<64x64xbf16>, vector<64x64xbf16>, vector<64x64xf32> -> vector<64x64xf32>
    %c0_28 = arith.constant 0 : index
    %c0_29 = arith.constant 0 : index
    %38 = vector.load %arg12[%c0_28, %c0_29] : memref<1x64xf32, #tpu.memory_space<vmem>>, vector<1x64xf32>
    %39 = vector.broadcast %38 : vector<1x64xf32> to vector<64x64xf32>
    %40 = arith.addf %37, %39 : vector<64x64xf32>
    %cst_30 = arith.constant 0.000000e+00 : f32
    %41 = vector.broadcast %cst_30 : f32 to vector<64x64xf32>
    %42 = arith.maximumf %40, %41 : vector<64x64xf32>
    %c0_31 = arith.constant 0 : index
    %c0_32 = arith.constant 0 : index
    %43 = vector.load %arg13[%c0_31, %c0_32] : memref<1x64xf32, #tpu.memory_space<vmem>>, vector<1x64xf32>
    %44 = vector.broadcast %43 : vector<1x64xf32> to vector<64x64xf32>
    %45 = arith.mulf %42, %44 : vector<64x64xf32>
    %cst_33 = arith.constant dense<0.000000e+00> : vector<64xf32>
    %46 = vector.multi_reduction <add>, %45, %cst_33 [1] : vector<64x64xf32> to vector<64xf32>
    %47 = vector.shape_cast %46 : vector<64xf32> to vector<64x1xf32>
    %c0_34 = arith.constant 0 : index
    %c0_35 = arith.constant 0 : index
    %48 = vector.load %arg14[%c0_34, %c0_35] : memref<1x1xf32, #tpu.memory_space<vmem>>, vector<1x1xf32>
    %49 = vector.broadcast %48 : vector<1x1xf32> to vector<64x1xf32>
    %50 = arith.addf %47, %49 : vector<64x1xf32>
    %c0_36 = arith.constant 0 : index
    %c0_37 = arith.constant 0 : index
    %51 = vector.load %arg15[%c0_36, %c0_37] : memref<64x1xf32, #tpu.memory_space<vmem>>, vector<64x1xf32>
    tpu.vector_store %arg15[%c0_36, %c0_37], %50 {strides = array<i32>} : memref<64x1xf32, #tpu.memory_space<vmem>>, vector<64x1xf32>,
    return
  }
  func.func @transform_0(%arg0: i32) -> (i32, i32) {
    %c0_i32 = arith.constant 0 : i32
    %c0_i32_0 = arith.constant 0 : i32
    return %arg0, %c0_i32 : i32, i32
  }
  func.func @transform_1(%arg0: i32) -> (i32, i32) {
    %c0_i32 = arith.constant 0 : i32
    %c0_i32_0 = arith.constant 0 : i32
    return %arg0, %c0_i32 : i32, i32
  }
  func.func @transform_2(%arg0: i32) -> (i32, i32) {
    %c0_i32 = arith.constant 0 : i32
    %c0_i32_0 = arith.constant 0 : i32
    %c0_i32_1 = arith.constant 0 : i32
    return %c0_i32, %c0_i32_0 : i32, i32
  }
  func.func @transform_3(%arg0: i32) -> (i32, i32) {
    %c0_i32 = arith.constant 0 : i32
    %c0_i32_0 = arith.constant 0 : i32
    %c0_i32_1 = arith.constant 0 : i32
    return %c0_i32, %c0_i32_0 : i32, i32
  }
  func.func @transform_4(%arg0: i32) -> (i32, i32) {
    %c0_i32 = arith.constant 0 : i32
    %c0_i32_0 = arith.constant 0 : i32
    %c0_i32_1 = arith.constant 0 : i32
    return %c0_i32, %c0_i32_0 : i32, i32
  }
  func.func @transform_5(%arg0: i32) -> (i32, i32) {
    %c0_i32 = arith.constant 0 : i32
    %c0_i32_0 = arith.constant 0 : i32
    %c0_i32_1 = arith.constant 0 : i32
    return %c0_i32, %c0_i32_0 : i32, i32
  }
  func.func @transform_6(%arg0: i32) -> (i32, i32) {
    %c0_i32 = arith.constant 0 : i32
    %c0_i32_0 = arith.constant 0 : i32
    %c0_i32_1 = arith.constant 0 : i32
    return %c0_i32, %c0_i32_0 : i32, i32
  }
  func.func @transform_7(%arg0: i32) -> (i32, i32) {
    %c0_i32 = arith.constant 0 : i32
    %c0_i32_0 = arith.constant 0 : i32
    %c0_i32_1 = arith.constant 0 : i32
    return %c0_i32, %c0_i32_0 : i32, i32
  }
  func.func @transform_8(%arg0: i32) -> (i32, i32) {
    %c0_i32 = arith.constant 0 : i32
    %c0_i32_0 = arith.constant 0 : i32
    %c0_i32_1 = arith.constant 0 : i32
    return %c0_i32, %c0_i32_0 : i32, i32
  }
  func.func @transform_9(%arg0: i32) -> (i32, i32) {
    %c0_i32 = arith.constant 0 : i32
    %c0_i32_0 = arith.constant 0 : i32
    %c0_i32_1 = arith.constant 0 : i32
    return %c0_i32, %c0_i32_0 : i32, i32
  }
  func.func @transform_10(%arg0: i32) -> (i32, i32) {
    %c0_i32 = arith.constant 0 : i32
    %c0_i32_0 = arith.constant 0 : i32
    %c0_i32_1 = arith.constant 0 : i32
    return %c0_i32, %c0_i32_0 : i32, i32
  }
  func.func @transform_11(%arg0: i32) -> (i32, i32) {
    %c0_i32 = arith.constant 0 : i32
    %c0_i32_0 = arith.constant 0 : i32
    %c0_i32_1 = arith.constant 0 : i32
    return %c0_i32, %c0_i32_0 : i32, i32
  }
  func.func @transform_12(%arg0: i32) -> (i32, i32) {
    %c0_i32 = arith.constant 0 : i32
    %c0_i32_0 = arith.constant 0 : i32
    %c0_i32_1 = arith.constant 0 : i32
    return %c0_i32, %c0_i32_0 : i32, i32
  }
  func.func @transform_13(%arg0: i32) -> (i32, i32) {
    %c0_i32 = arith.constant 0 : i32
    %c0_i32_0 = arith.constant 0 : i32
    %c0_i32_1 = arith.constant 0 : i32
    return %c0_i32, %c0_i32_0 : i32, i32
  }
  func.func @transform_14(%arg0: i32) -> (i32, i32) {
    %c0_i32 = arith.constant 0 : i32
    %c0_i32_0 = arith.constant 0 : i32
    return %arg0, %c0_i32 : i32, i32
  }
}

</mosaic_0001>

<llo_original>
// kernel: tpu_custom_call.1
$region0: #{tpu_custom_call.1}
  #allocation0 [shape = 'u32[]', space=smem, size = 0x4, offset = 0x4, fixed_abs, tag = 'smem constant byte address 0x4 - core index']
  #allocation1 [shape = 'u32[72,128]{1,0:T(1,128)}', space=vmem, size = 0x9000, scoped, tag = 'internal scratch']
  #allocation2 [shape = 'f32[1,1]{1,0:T(1,128)S(1)}', space=vmem, size = 0x200, scoped, tag = 'scoped memory for tpu_custom_call.1']
  %s0 = inlined_call_operand.vmem [shape: bf16[64,128], index: 0, kind: input, shape index: {}]
  %s1 = inlined_call_operand.vmem [shape: bf16[64,128], index: 1, kind: input, shape index: {}]
  %s2 = inlined_call_operand.hbm [shape: bf16[128,256], index: 2, kind: input, shape index: {}]
  %s3 = inlined_call_operand.hbm [shape: f32[1,256], index: 3, kind: input, shape index: {}]
  %s4 = inlined_call_operand.hbm [shape: bf16[256,512], index: 4, kind: input, shape index: {}]
  %s5 = inlined_call_operand.vmem [shape: f32[1,512], index: 5, kind: input, shape index: {}]
  %s6 = inlined_call_operand.hbm [shape: bf16[512,128], index: 6, kind: input, shape index: {}]
  %s7 = inlined_call_operand.vmem [shape: f32[1,128], index: 7, kind: input, shape index: {}]
  %s8 = inlined_call_operand.vmem [shape: bf16[128,64], index: 8, kind: input, shape index: {}]
  %s9 = inlined_call_operand.vmem [shape: f32[1,64], index: 9, kind: input, shape index: {}]
  %s10 = inlined_call_operand.vmem [shape: bf16[64,64], index: 10, kind: input, shape index: {}]
  %s11 = inlined_call_operand.vmem [shape: f32[1,64], index: 11, kind: input, shape index: {}]
  %s12 = inlined_call_operand.vmem [shape: f32[1,64], index: 12, kind: input, shape index: {}]
  %s13 = inlined_call_operand.<no memory space> [shape: f32[1,1], index: 13, kind: input, shape index: {}]
  %s14 = inlined_call_operand.vmem [shape: f32[64,1], index: 14, kind: output, shape index: {}]
  %s15 = sld [smem:[#allocation0]]
  $region82: #{tpu_custom_call.1} parent=0
    _
  %s17 = ssub.s32 1, %s15
  %s18 = scalar_select 0, %s17, %s15
  %v19 = vstv %s13
  %20 = vst [vmem:[#allocation2] sm:$0x1] %v19
  $region1: #{tpu_custom_call.1} parent=0
    #allocation3 [shape = 'u8[65536]{0}', space=vmem, size = 0x10000, scoped, tag = 'input window, operand 2, single buffered']
    #allocation4 [shape = 's32[1]{0}', space=sflag, size = 0x4, scoped, tag = 'scoped memory for tpu_custom_call.1']
    #allocation5 [shape = 'u8[1024]{0}', space=vmem, size = 0x400, scoped, tag = 'input window, operand 3, single buffered']
    #allocation6 [shape = 's32[1]{0}', space=sflag, size = 0x4, scoped, tag = 'scoped memory for tpu_custom_call.1']
    #allocation7 [shape = 'u8[262144]{0}', space=vmem, size = 0x40000, scoped, tag = 'input window, operand 4, single buffered']
    #allocation8 [shape = 'u8[131072]{0}', space=vmem, size = 0x20000, scoped, tag = 'input window, operand 6, single buffered']
    #allocation9 [shape = 's32[1]{0}', space=sflag, size = 0x4, scoped, tag = 'scoped memory for tpu_custom_call.1']
    %21 = vsyncpa [#allocation4], 0
    %22 = vsyncpa [#allocation6], 0
    %23 = vsyncpa [#allocation9], 0
    // Predicated region
    $region2: #{tpu_custom_call.1} parent=1 // pred_check
      _
    $region3: #{tpu_custom_call.1} parent=1 // pred_check_branch
      %25 = sbr.rel (0) target = $region5
    $region4: #{tpu_custom_call.1} parent=1 // pred_region
      _
    $region5: #{tpu_custom_call.1} parent=1 // pred_fallthru
      _
    // Predicated region
    $region6: #{tpu_custom_call.1} parent=1 // pred_check
      _
    $region7: #{tpu_custom_call.1} parent=1 // pred_check_branch
      %27 = sbr.rel (0) target = $region9
    $region8: #{tpu_custom_call.1} parent=1 // pred_region
      _
    $region9: #{tpu_custom_call.1} parent=1 // pred_fallthru
      _
    // Predicated region
    $region10: #{tpu_custom_call.1} parent=1 // pred_check
      _
    $region11: #{tpu_custom_call.1} parent=1 // pred_check_branch
      %29 = sbr.rel (0) target = $region13
    $region12: #{tpu_custom_call.1} parent=1 // pred_region
      %31 = vsyncadd [#allocation4], 0
      %s32 = sshll.u32 %s2, 4
      %s33 = int_to_ptr.hbm [resolvable:$true] %s32
      %s34 = sshll.u32 [#allocation3], 4
      %s35 = int_to_ptr.vmem [resolvable:$true] %s34
      %40 = dma.hbm_to_vmem [thread:$0]  %s33, 2048, %s35, [#allocation4], 128, 128, 8
    $region13: #{tpu_custom_call.1} parent=1 // pred_fallthru
      _
    // Predicated region
    $region14: #{tpu_custom_call.1} parent=1 // pred_check
      _
    $region15: #{tpu_custom_call.1} parent=1 // pred_check_branch
      %42 = sbr.rel (0) target = $region17
    $region16: #{tpu_custom_call.1} parent=1 // pred_region
      %44 = vsyncadd [#allocation6], 0
      %s46 = sshll.u32 %s3, 4
      %s47 = int_to_ptr.hbm [resolvable:$true] %s46
      %s48 = sshll.u32 [#allocation5], 4
      %s49 = int_to_ptr.vmem [resolvable:$true] %s48
      %51 = dma.hbm_to_vmem [thread:$0]  %s47, 32, %s49, [#allocation6]
    $region17: #{tpu_custom_call.1} parent=1 // pred_fallthru
      _
    // Predicated region
    $region18: #{tpu_custom_call.1} parent=1 // pred_check
      _
    $region19: #{tpu_custom_call.1} parent=1 // pred_check_branch
      %53 = sbr.rel (0) target = $region21
    $region20: #{tpu_custom_call.1} parent=1 // pred_region
      %55 = vsyncadd [#allocation6], 0
      %s56 = sshll.u32 %s4, 4
      %s57 = int_to_ptr.hbm [resolvable:$true] %s56
      %s58 = sshll.u32 [#allocation7], 4
      %s59 = int_to_ptr.vmem [resolvable:$true] %s58
      %64 = dma.hbm_to_vmem [thread:$0]  %s57, 8192, %s59, [#allocation6], 256, 256, 16
    $region21: #{tpu_custom_call.1} parent=1 // pred_fallthru
      _
    // Predicated region
    $region22: #{tpu_custom_call.1} parent=1 // pred_check
      _
    $region23: #{tpu_custom_call.1} parent=1 // pred_check_branch
      %66 = sbr.rel (0) target = $region25
    $region24: #{tpu_custom_call.1} parent=1 // pred_region
      _
    $region25: #{tpu_custom_call.1} parent=1 // pred_fallthru
      _
    // Predicated region
    $region26: #{tpu_custom_call.1} parent=1 // pred_check
      _
    $region27: #{tpu_custom_call.1} parent=1 // pred_check_branch
      %68 = sbr.rel (0) target = $region29
    $region28: #{tpu_custom_call.1} parent=1 // pred_region
      %70 = vsyncadd [#allocation9], 0
      %s71 = sshll.u32 %s6, 4
      %s72 = int_to_ptr.hbm [resolvable:$true] %s71
      %s73 = sshll.u32 [#allocation8], 4
      %s74 = int_to_ptr.vmem [resolvable:$true] %s73
      %79 = dma.hbm_to_vmem [thread:$0]  %s72, 4096, %s74, [#allocation9], 64, 64, 4
    $region29: #{tpu_custom_call.1} parent=1 // pred_fallthru
      _
    // Predicated region
    $region30: #{tpu_custom_call.1} parent=1 // pred_check
      _
    $region31: #{tpu_custom_call.1} parent=1 // pred_check_branch
      %81 = sbr.rel (0) target = $region33
    $region32: #{tpu_custom_call.1} parent=1 // pred_region
      _
    $region33: #{tpu_custom_call.1} parent=1 // pred_fallthru
      _
    // Predicated region
    $region34: #{tpu_custom_call.1} parent=1 // pred_check
      _
    $region35: #{tpu_custom_call.1} parent=1 // pred_check_branch
      %83 = sbr.rel (0) target = $region37
    $region36: #{tpu_custom_call.1} parent=1 // pred_region
      _
    $region37: #{tpu_custom_call.1} parent=1 // pred_fallthru
      _
    // Predicated region
    $region38: #{tpu_custom_call.1} parent=1 // pred_check
      _
    $region39: #{tpu_custom_call.1} parent=1 // pred_check_branch
      %85 = sbr.rel (0) target = $region41
    $region40: #{tpu_custom_call.1} parent=1 // pred_region
      _
    $region41: #{tpu_custom_call.1} parent=1 // pred_fallthru
      _
    // Predicated region
    $region42: #{tpu_custom_call.1} parent=1 // pred_check
      _
    $region43: #{tpu_custom_call.1} parent=1 // pred_check_branch
      %87 = sbr.rel (0) target = $region45
    $region44: #{tpu_custom_call.1} parent=1 // pred_region
      _
    $region45: #{tpu_custom_call.1} parent=1 // pred_fallthru
      _
    // Predicated region
    $region46: #{tpu_custom_call.1} parent=1 // pred_check
      _
    $region47: #{tpu_custom_call.1} parent=1 // pred_check_branch
      %89 = sbr.rel (0) target = $region49
    $region48: #{tpu_custom_call.1} parent=1 // pred_region
      _
    $region49: #{tpu_custom_call.1} parent=1 // pred_fallthru
      _
    // Predicated region
    $region50: #{tpu_custom_call.1} parent=1 // pred_check
      _
    $region51: #{tpu_custom_call.1} parent=1 // pred_check_branch
      %91 = sbr.rel (0) target = $region53
    $region52: #{tpu_custom_call.1} parent=1 // pred_region
      _
    $region53: #{tpu_custom_call.1} parent=1 // pred_fallthru
      _
    // Predicated region
    $region54: #{tpu_custom_call.1} parent=1 // pred_check
      _
    $region55: #{tpu_custom_call.1} parent=1 // pred_check_branch
      %93 = sbr.rel (0) target = $region57
    $region56: #{tpu_custom_call.1} parent=1 // pred_region
      _
    $region57: #{tpu_custom_call.1} parent=1 // pred_fallthru
      _
    // Predicated region
    $region58: #{tpu_custom_call.1} parent=1 // pred_check
      _
    $region59: #{tpu_custom_call.1} parent=1 // pred_check_branch
      %95 = sbr.rel (0) target = $region61
    $region60: #{tpu_custom_call.1} parent=1 // pred_region
      %97 = dma.done [#allocation4], 2048
    $region61: #{tpu_custom_call.1} parent=1 // pred_fallthru
      _
    // Predicated region
    $region62: #{tpu_custom_call.1} parent=1 // pred_check
      _
    $region63: #{tpu_custom_call.1} parent=1 // pred_check_branch
      %99 = sbr.rel (0) target = $region65
    $region64: #{tpu_custom_call.1} parent=1 // pred_region
      %101 = dma.done [#allocation6], 32
    $region65: #{tpu_custom_call.1} parent=1 // pred_fallthru
      _
    // Predicated region
    $region66: #{tpu_custom_call.1} parent=1 // pred_check
      _
    $region67: #{tpu_custom_call.1} parent=1 // pred_check_branch
      %103 = sbr.rel (0) target = $region69
    $region68: #{tpu_custom_call.1} parent=1 // pred_region
      %105 = dma.done [#allocation6], 8192
    $region69: #{tpu_custom_call.1} parent=1 // pred_fallthru
      _
    // Predicated region
    $region70: #{tpu_custom_call.1} parent=1 // pred_check
      _
    $region71: #{tpu_custom_call.1} parent=1 // pred_check_branch
      %107 = sbr.rel (0) target = $region73
    $region72: #{tpu_custom_call.1} parent=1 // pred_region
      %109 = dma.done [#allocation9], 4096
    $region73: #{tpu_custom_call.1} parent=1 // pred_fallthru
      _
    %v111 = vld [vmem:[%s0] sm:$0xf]
    %v112 = vld [vmem:[%s0 + $0x4] sm:$0xf]
    %v113 = vld [vmem:[%s0 + $0x8] sm:$0xf]
    %v114 = vld [vmem:[%s0 + $0xc] sm:$0xf]
    %v115 = vld [vmem:[%s0 + $0x10] sm:$0xf]
    %v116 = vld [vmem:[%s0 + $0x14] sm:$0xf]
    %v117 = vld [vmem:[%s0 + $0x18] sm:$0xf]
    %v118 = vld [vmem:[%s0 + $0x1c] sm:$0xf]
    %v119 = vld [vmem:[%s1] sm:$0xf]
    %v120 = vld [vmem:[%s1 + $0x4] sm:$0xf]
    %v121 = vld [vmem:[%s1 + $0x8] sm:$0xf]
    %v122 = vld [vmem:[%s1 + $0xc] sm:$0xf]
    %v123 = vld [vmem:[%s1 + $0x10] sm:$0xf]
    %v124 = vld [vmem:[%s1 + $0x14] sm:$0xf]
    %v125 = vld [vmem:[%s1 + $0x18] sm:$0xf]
    %v126 = vld [vmem:[%s1 + $0x1c] sm:$0xf]
    %v135 = vunpack.c.l.b16 %v111
    %v136 = vunpack.c.l.b16 %v112
    %v137 = vunpack.c.l.b16 %v113
    %v138 = vunpack.c.l.b16 %v114
    %v139 = vunpack.c.l.b16 %v115
    %v140 = vunpack.c.l.b16 %v116
    %v141 = vunpack.c.l.b16 %v117
    %v142 = vunpack.c.l.b16 %v118
    %v143 = vpack.c.b16 %v136, %v135
    %v144 = vpack.c.b16 %v138, %v137
    %v145 = vpack.c.b16 %v140, %v139
    %v146 = vpack.c.b16 %v142, %v141
    %v159 = vunpack.c.l.b16 %v119
    %v160 = vunpack.c.l.b16 %v120
    %v161 = vunpack.c.l.b16 %v121
    %v162 = vunpack.c.l.b16 %v122
    %v163 = vunpack.c.l.b16 %v123
    %v164 = vunpack.c.l.b16 %v124
    %v165 = vunpack.c.l.b16 %v125
    %v166 = vunpack.c.l.b16 %v126
    %v167 = vpack.c.b16 %v160, %v159
    %v168 = vpack.c.b16 %v162, %v161
    %v169 = vpack.c.b16 %v164, %v163
    %v170 = vpack.c.b16 %v166, %v165
    %v175 = vld [vmem:[#allocation3] sm:$0xff]
    %v176 = vld [vmem:[#allocation3 + $0x8] sm:$0xff]
    %v177 = vld [vmem:[#allocation3 + $0x10] sm:$0xff]
    %v178 = vld [vmem:[#allocation3 + $0x18] sm:$0xff]
    %v179 = vld [vmem:[#allocation3 + $0x20] sm:$0xff]
    %v180 = vld [vmem:[#allocation3 + $0x28] sm:$0xff]
    %v181 = vld [vmem:[#allocation3 + $0x30] sm:$0xff]
    %v182 = vld [vmem:[#allocation3 + $0x38] sm:$0xff]
    %v183 = vld [vmem:[#allocation3 + $0x40] sm:$0xff]
    %v184 = vld [vmem:[#allocation3 + $0x48] sm:$0xff]
    %v185 = vld [vmem:[#allocation3 + $0x50] sm:$0xff]
    %v186 = vld [vmem:[#allocation3 + $0x58] sm:$0xff]
    %v187 = vld [vmem:[#allocation3 + $0x60] sm:$0xff]
    %v188 = vld [vmem:[#allocation3 + $0x68] sm:$0xff]
    %v189 = vld [vmem:[#allocation3 + $0x70] sm:$0xff]
    %v190 = vld [vmem:[#allocation3 + $0x78] sm:$0xff]
    %v191 = vld [vmem:[#allocation5] sm:$0x3]
    %v193 = vperm.slane %v191, 0
    %v194 = vperm.slane %v191, 1
    %v213 = vunpack.c.l.b16 %v175
    %v214 = vunpack.c.h.b16 %v175
    %v215 = vunpack.c.l.b16 %v176
    %v216 = vunpack.c.h.b16 %v176
    %v217 = vunpack.c.l.b16 %v177
    %v218 = vunpack.c.h.b16 %v177
    %v219 = vunpack.c.l.b16 %v178
    %v220 = vunpack.c.h.b16 %v178
    %v221 = vunpack.c.l.b16 %v179
    %v222 = vunpack.c.h.b16 %v179
    %v223 = vunpack.c.l.b16 %v180
    %v224 = vunpack.c.h.b16 %v180
    %v225 = vunpack.c.l.b16 %v181
    %v226 = vunpack.c.h.b16 %v181
    %v227 = vunpack.c.l.b16 %v182
    %v228 = vunpack.c.h.b16 %v182
    %v229 = vunpack.c.l.b16 %v183
    %v230 = vunpack.c.h.b16 %v183
    %v231 = vunpack.c.l.b16 %v184
    %v232 = vunpack.c.h.b16 %v184
    %v233 = vunpack.c.l.b16 %v185
    %v234 = vunpack.c.h.b16 %v185
    %v235 = vunpack.c.l.b16 %v186
    %v236 = vunpack.c.h.b16 %v186
    %v237 = vunpack.c.l.b16 %v187
    %v238 = vunpack.c.h.b16 %v187
    %v239 = vunpack.c.l.b16 %v188
    %v240 = vunpack.c.h.b16 %v188
    %v241 = vunpack.c.l.b16 %v189
    %v242 = vunpack.c.h.b16 %v189
    %v243 = vunpack.c.l.b16 %v190
    %v244 = vunpack.c.h.b16 %v190
    %v245 = vpack.c.b16 %v215, %v213
    %v246 = vpack.c.b16 %v216, %v214
    %v247 = vpack.c.b16 %v219, %v217
    %v248 = vpack.c.b16 %v220, %v218
    %v249 = vpack.c.b16 %v223, %v221
    %v250 = vpack.c.b16 %v224, %v222
    %v251 = vpack.c.b16 %v227, %v225
    %v252 = vpack.c.b16 %v228, %v226
    %v253 = vpack.c.b16 %v231, %v229
    %v254 = vpack.c.b16 %v232, %v230
    %v255 = vpack.c.b16 %v235, %v233
    %v256 = vpack.c.b16 %v236, %v234
    %v257 = vpack.c.b16 %v239, %v237
    %v258 = vpack.c.b16 %v240, %v238
    %v259 = vpack.c.b16 %v243, %v241
    %v260 = vpack.c.b16 %v244, %v242
    %277 = vmatpush.bf16.msra.mxu0 %v259
    %278 = vmatpush.bf16.msra.mxu0 %v257
    %279 = vmatpush.bf16.msra.mxu0 %v255
    %280 = vmatpush.bf16.msra.mxu0 %v253
    %281 = vmatpush.bf16.msra.mxu0 %v251
    %282 = vmatpush.bf16.msra.mxu0 %v249
    %283 = vmatpush.bf16.msra.mxu0 %v247
    %284 = vmatpush.bf16.msra.mxu0 %v245
    %285 = vmatmul.bf16.gmra.mxu0 %v143
    %v286 = vpop.f32.mrf.mxu0
    %v287 = vadd.f32 %v193, %v286
    %v288 = vpop.f32.mrf.mxu0
    %v289 = vadd.f32 %v193, %v288
    %290 = vmatmul.bf16.gmra.mxu0 %v144
    %v291 = vpop.f32.mrf.mxu0
    %v292 = vadd.f32 %v193, %v291
    %v293 = vpop.f32.mrf.mxu0
    %v294 = vadd.f32 %v193, %v293
    %295 = vmatmul.bf16.gmra.mxu0 %v145
    %v296 = vpop.f32.mrf.mxu0
    %v297 = vadd.f32 %v193, %v296
    %v298 = vpop.f32.mrf.mxu0
    %v299 = vadd.f32 %v193, %v298
    %300 = vmatmul.bf16.gmra.mxu0 %v146
    %v301 = vpop.f32.mrf.mxu0
    %v302 = vadd.f32 %v193, %v301
    %v303 = vpop.f32.mrf.mxu0
    %v304 = vadd.f32 %v193, %v303
    %305 = vmatmul.bf16.gmra.mxu0 %v167
    %v306 = vpop.f32.mrf.mxu0
    %v307 = vadd.f32 %v193, %v306
    %v308 = vpop.f32.mrf.mxu0
    %v309 = vadd.f32 %v193, %v308
    %310 = vmatmul.bf16.gmra.mxu0 %v168
    %v311 = vpop.f32.mrf.mxu0
    %v312 = vadd.f32 %v193, %v311
    %v313 = vpop.f32.mrf.mxu0
    %v314 = vadd.f32 %v193, %v313
    %315 = vmatmul.bf16.gmra.mxu0 %v169
    %v316 = vpop.f32.mrf.mxu0
    %v317 = vadd.f32 %v193, %v316
    %v318 = vpop.f32.mrf.mxu0
    %v319 = vadd.f32 %v193, %v318
    %320 = vmatmul.bf16.gmra.mxu0 %v170
    %v321 = vpop.f32.mrf.mxu0
    %v322 = vadd.f32 %v193, %v321
    %v323 = vpop.f32.mrf.mxu0
    %v324 = vadd.f32 %v193, %v323
    %325 = vdwg.mxu0
    %326 = vmatpush.bf16.msra.mxu0 %v260
    %327 = vmatpush.bf16.msra.mxu0 %v258
    %328 = vmatpush.bf16.msra.mxu0 %v256
    %329 = vmatpush.bf16.msra.mxu0 %v254
    %330 = vmatpush.bf16.msra.mxu0 %v252
    %331 = vmatpush.bf16.msra.mxu0 %v250
    %332 = vmatpush.bf16.msra.mxu0 %v248
    %333 = vmatpush.bf16.msra.mxu0 %v246
    %334 = vmatmul.bf16.gmra.mxu0 %v143
    %v335 = vpop.f32.mrf.mxu0
    %v336 = vadd.f32 %v194, %v335
    %v337 = vpop.f32.mrf.mxu0
    %v338 = vadd.f32 %v194, %v337
    %339 = vmatmul.bf16.gmra.mxu0 %v144
    %v340 = vpop.f32.mrf.mxu0
    %v341 = vadd.f32 %v194, %v340
    %v342 = vpop.f32.mrf.mxu0
    %v343 = vadd.f32 %v194, %v342
    %344 = vmatmul.bf16.gmra.mxu0 %v145
    %v345 = vpop.f32.mrf.mxu0
    %v346 = vadd.f32 %v194, %v345
    %v347 = vpop.f32.mrf.mxu0
    %v348 = vadd.f32 %v194, %v347
    %349 = vmatmul.bf16.gmra.mxu0 %v146
    %v350 = vpop.f32.mrf.mxu0
    %v351 = vadd.f32 %v194, %v350
    %v352 = vpop.f32.mrf.mxu0
    %v353 = vadd.f32 %v194, %v352
    %354 = vmatmul.bf16.gmra.mxu0 %v167
    %v355 = vpop.f32.mrf.mxu0
    %v356 = vadd.f32 %v194, %v355
    %v357 = vpop.f32.mrf.mxu0
    %v358 = vadd.f32 %v194, %v357
    %359 = vmatmul.bf16.gmra.mxu0 %v168
    %v360 = vpop.f32.mrf.mxu0
    %v361 = vadd.f32 %v194, %v360
    %v362 = vpop.f32.mrf.mxu0
    %v363 = vadd.f32 %v194, %v362
    %364 = vmatmul.bf16.gmra.mxu0 %v169
    %v365 = vpop.f32.mrf.mxu0
    %v366 = vadd.f32 %v194, %v365
    %v367 = vpop.f32.mrf.mxu0
    %v368 = vadd.f32 %v194, %v367
    %369 = vmatmul.bf16.gmra.mxu0 %v170
    %v370 = vpop.f32.mrf.mxu0
    %v371 = vadd.f32 %v194, %v370
    %v372 = vpop.f32.mrf.mxu0
    %v373 = vadd.f32 %v194, %v372
    %374 = vdwg.mxu0
    %v375 = vmax.f32 %v287, 0.0
    %v376 = vmax.f32 %v336, 0.0
    %v377 = vmax.f32 %v289, 0.0
    %v378 = vmax.f32 %v338, 0.0
    %v379 = vmax.f32 %v292, 0.0
    %v380 = vmax.f32 %v341, 0.0
    %v381 = vmax.f32 %v294, 0.0
    %v382 = vmax.f32 %v343, 0.0
    %v383 = vmax.f32 %v297, 0.0
    %v384 = vmax.f32 %v346, 0.0
    %v385 = vmax.f32 %v299, 0.0
    %v386 = vmax.f32 %v348, 0.0
    %v387 = vmax.f32 %v302, 0.0
    %v388 = vmax.f32 %v351, 0.0
    %v389 = vmax.f32 %v304, 0.0
    %v390 = vmax.f32 %v353, 0.0
    %v391 = vmax.f32 %v307, 0.0
    %v392 = vmax.f32 %v356, 0.0
    %v393 = vmax.f32 %v309, 0.0
    %v394 = vmax.f32 %v358, 0.0
    %v395 = vmax.f32 %v312, 0.0
    %v396 = vmax.f32 %v361, 0.0
    %v397 = vmax.f32 %v314, 0.0
    %v398 = vmax.f32 %v363, 0.0
    %v399 = vmax.f32 %v317, 0.0
    %v400 = vmax.f32 %v366, 0.0
    %v401 = vmax.f32 %v319, 0.0
    %v402 = vmax.f32 %v368, 0.0
    %v403 = vmax.f32 %v322, 0.0
    %v404 = vmax.f32 %v371, 0.0
    %v405 = vmax.f32 %v324, 0.0
    %v406 = vmax.f32 %v373, 0.0
    %v407 = vpack.c.bf16 %v377, %v375
    %v408 = vpack.c.bf16 %v378, %v376
    %v409 = vpack.c.bf16 %v381, %v379
    %v410 = vpack.c.bf16 %v382, %v380
    %v411 = vpack.c.bf16 %v385, %v383
    %v412 = vpack.c.bf16 %v386, %v384
    %v413 = vpack.c.bf16 %v389, %v387
    %v414 = vpack.c.bf16 %v390, %v388
    %v415 = vpack.c.bf16 %v393, %v391
    %v416 = vpack.c.bf16 %v394, %v392
    %v417 = vpack.c.bf16 %v397, %v395
    %v418 = vpack.c.bf16 %v398, %v396
    %v419 = vpack.c.bf16 %v401, %v399
    %v420 = vpack.c.bf16 %v402, %v400
    %v421 = vpack.c.bf16 %v405, %v403
    %v422 = vpack.c.bf16 %v406, %v404
    %v423 = vld [vmem:[#allocation7] sm:$0xff]
    %v424 = vld [vmem:[#allocation7 + $0x8] sm:$0xff]
    %v425 = vld [vmem:[#allocation7 + $0x10] sm:$0xff]
    %v426 = vld [vmem:[#allocation7 + $0x18] sm:$0xff]
    %v427 = vld [vmem:[#allocation7 + $0x20] sm:$0xff]
    %v428 = vld [vmem:[#allocation7 + $0x28] sm:$0xff]
    %v429 = vld [vmem:[#allocation7 + $0x30] sm:$0xff]
    %v430 = vld [vmem:[#allocation7 + $0x38] sm:$0xff]
    %v431 = vld [vmem:[#allocation7 + $0x40] sm:$0xff]
    %v432 = vld [vmem:[#allocation7 + $0x48] sm:$0xff]
    %v433 = vld [vmem:[#allocation7 + $0x50] sm:$0xff]
    %v434 = vld [vmem:[#allocation7 + $0x58] sm:$0xff]
    %v435 = vld [vmem:[#allocation7 + $0x60] sm:$0xff]
    %v436 = vld [vmem:[#allocation7 + $0x68] sm:$0xff]
    %v437 = vld [vmem:[#allocation7 + $0x70] sm:$0xff]
    %v438 = vld [vmem:[#allocation7 + $0x78] sm:$0xff]
    %v439 = vld [vmem:[#allocation7 + $0x80] sm:$0xff]
    %v440 = vld [vmem:[#allocation7 + $0x88] sm:$0xff]
    %v441 = vld [vmem:[#allocation7 + $0x90] sm:$0xff]
    %v442 = vld [vmem:[#allocation7 + $0x98] sm:$0xff]
    %v443 = vld [vmem:[#allocation7 + $0xa0] sm:$0xff]
    %v444 = vld [vmem:[#allocation7 + $0xa8] sm:$0xff]
    %v445 = vld [vmem:[#allocation7 + $0xb0] sm:$0xff]
    %v446 = vld [vmem:[#allocation7 + $0xb8] sm:$0xff]
    %v447 = vld [vmem:[#allocation7 + $0xc0] sm:$0xff]
    %v448 = vld [vmem:[#allocation7 + $0xc8] sm:$0xff]
    %v449 = vld [vmem:[#allocation7 + $0xd0] sm:$0xff]
    %v450 = vld [vmem:[#allocation7 + $0xd8] sm:$0xff]
    %v451 = vld [vmem:[#allocation7 + $0xe0] sm:$0xff]
    %v452 = vld [vmem:[#allocation7 + $0xe8] sm:$0xff]
    %v453 = vld [vmem:[#allocation7 + $0xf0] sm:$0xff]
    %v454 = vld [vmem:[#allocation7 + $0xf8] sm:$0xff]
    %v455 = vld [vmem:[#allocation7 + $0x100] sm:$0xff]
    %v456 = vld [vmem:[#allocation7 + $0x108] sm:$0xff]
    %v457 = vld [vmem:[#allocation7 + $0x110] sm:$0xff]
    %v458 = vld [vmem:[#allocation7 + $0x118] sm:$0xff]
    %v459 = vld [vmem:[#allocation7 + $0x120] sm:$0xff]
    %v460 = vld [vmem:[#allocation7 + $0x128] sm:$0xff]
    %v461 = vld [vmem:[#allocation7 + $0x130] sm:$0xff]
    %v462 = vld [vmem:[#allocation7 + $0x138] sm:$0xff]
    %v463 = vld [vmem:[#allocation7 + $0x140] sm:$0xff]
    %v464 = vld [vmem:[#allocation7 + $0x148] sm:$0xff]
    %v465 = vld [vmem:[#allocation7 + $0x150] sm:$0xff]
    %v466 = vld [vmem:[#allocation7 + $0x158] sm:$0xff]
    %v467 = vld [vmem:[#allocation7 + $0x160] sm:$0xff]
    %v468 = vld [vmem:[#allocation7 + $0x168] sm:$0xff]
    %v469 = vld [vmem:[#allocation7 + $0x170] sm:$0xff]
    %v470 = vld [vmem:[#allocation7 + $0x178] sm:$0xff]
    %v471 = vld [vmem:[#allocation7 + $0x180] sm:$0xff]
    %v472 = vld [vmem:[#allocation7 + $0x188] sm:$0xff]
    %v473 = vld [vmem:[#allocation7 + $0x190] sm:$0xff]
    %v474 = vld [vmem:[#allocation7 + $0x198] sm:$0xff]
    %v475 = vld [vmem:[#allocation7 + $0x1a0] sm:$0xff]
    %v476 = vld [vmem:[#allocation7 + $0x1a8] sm:$0xff]
    %v477 = vld [vmem:[#allocation7 + $0x1b0] sm:$0xff]
    %v478 = vld [vmem:[#allocation7 + $0x1b8] sm:$0xff]
    %v479 = vld [vmem:[#allocation7 + $0x1c0] sm:$0xff]
    %v480 = vld [vmem:[#allocation7 + $0x1c8] sm:$0xff]
    %v481 = vld [vmem:[#allocation7 + $0x1d0] sm:$0xff]
    %v482 = vld [vmem:[#allocation7 + $0x1d8] sm:$0xff]
    %v483 = vld [vmem:[#allocation7 + $0x1e0] sm:$0xff]
    %v484 = vld [vmem:[#allocation7 + $0x1e8] sm:$0xff]
    %v485 = vld [vmem:[#allocation7 + $0x1f0] sm:$0xff]
    %v486 = vld [vmem:[#allocation7 + $0x1f8] sm:$0xff]
    %v487 = vld [vmem:[%s5] sm:$0xf]
    %v489 = vperm.slane %v487, 0
    %v490 = vperm.slane %v487, 1
    %v491 = vperm.slane %v487, 2
    %v492 = vperm.slane %v487, 3
    %v561 = vunpack.c.l.b16 %v423
    %v562 = vunpack.c.h.b16 %v423
    %v563 = vunpack.c.l.b16 %v424
    %v564 = vunpack.c.h.b16 %v424
    %v565 = vunpack.c.l.b16 %v425
    %v566 = vunpack.c.h.b16 %v425
    %v567 = vunpack.c.l.b16 %v426
    %v568 = vunpack.c.h.b16 %v426
    %v569 = vunpack.c.l.b16 %v427
    %v570 = vunpack.c.h.b16 %v427
    %v571 = vunpack.c.l.b16 %v428
    %v572 = vunpack.c.h.b16 %v428
    %v573 = vunpack.c.l.b16 %v429
    %v574 = vunpack.c.h.b16 %v429
    %v575 = vunpack.c.l.b16 %v430
    %v576 = vunpack.c.h.b16 %v430
    %v577 = vunpack.c.l.b16 %v431
    %v578 = vunpack.c.h.b16 %v431
    %v579 = vunpack.c.l.b16 %v432
    %v580 = vunpack.c.h.b16 %v432
    %v581 = vunpack.c.l.b16 %v433
    %v582 = vunpack.c.h.b16 %v433
    %v583 = vunpack.c.l.b16 %v434
    %v584 = vunpack.c.h.b16 %v434
    %v585 = vunpack.c.l.b16 %v435
    %v586 = vunpack.c.h.b16 %v435
    %v587 = vunpack.c.l.b16 %v436
    %v588 = vunpack.c.h.b16 %v436
    %v589 = vunpack.c.l.b16 %v437
    %v590 = vunpack.c.h.b16 %v437
    %v591 = vunpack.c.l.b16 %v438
    %v592 = vunpack.c.h.b16 %v438
    %v593 = vunpack.c.l.b16 %v439
    %v594 = vunpack.c.h.b16 %v439
    %v595 = vunpack.c.l.b16 %v440
    %v596 = vunpack.c.h.b16 %v440
    %v597 = vunpack.c.l.b16 %v441
    %v598 = vunpack.c.h.b16 %v441
    %v599 = vunpack.c.l.b16 %v442
    %v600 = vunpack.c.h.b16 %v442
    %v601 = vunpack.c.l.b16 %v443
    %v602 = vunpack.c.h.b16 %v443
    %v603 = vunpack.c.l.b16 %v444
    %v604 = vunpack.c.h.b16 %v444
    %v605 = vunpack.c.l.b16 %v445
    %v606 = vunpack.c.h.b16 %v445
    %v607 = vunpack.c.l.b16 %v446
    %v608 = vunpack.c.h.b16 %v446
    %v609 = vunpack.c.l.b16 %v447
    %v610 = vunpack.c.h.b16 %v447
    %v611 = vunpack.c.l.b16 %v448
    %v612 = vunpack.c.h.b16 %v448
    %v613 = vunpack.c.l.b16 %v449
    %v614 = vunpack.c.h.b16 %v449
    %v615 = vunpack.c.l.b16 %v450
    %v616 = vunpack.c.h.b16 %v450
    %v617 = vunpack.c.l.b16 %v451
    %v618 = vunpack.c.h.b16 %v451
    %v619 = vunpack.c.l.b16 %v452
    %v620 = vunpack.c.h.b16 %v452
    %v621 = vunpack.c.l.b16 %v453
    %v622 = vunpack.c.h.b16 %v453
    %v623 = vunpack.c.l.b16 %v454
    %v624 = vunpack.c.h.b16 %v454
    %v625 = vunpack.c.l.b16 %v455
    %v626 = vunpack.c.h.b16 %v455
    %v627 = vunpack.c.l.b16 %v456
    %v628 = vunpack.c.h.b16 %v456
    %v629 = vunpack.c.l.b16 %v457
    %v630 = vunpack.c.h.b16 %v457
    %v631 = vunpack.c.l.b16 %v458
    %v632 = vunpack.c.h.b16 %v458
    %v633 = vunpack.c.l.b16 %v459
    %v634 = vunpack.c.h.b16 %v459
    %v635 = vunpack.c.l.b16 %v460
    %v636 = vunpack.c.h.b16 %v460
    %v637 = vunpack.c.l.b16 %v461
    %v638 = vunpack.c.h.b16 %v461
    %v639 = vunpack.c.l.b16 %v462
    %v640 = vunpack.c.h.b16 %v462
    %v641 = vunpack.c.l.b16 %v463
    %v642 = vunpack.c.h.b16 %v463
    %v643 = vunpack.c.l.b16 %v464
    %v644 = vunpack.c.h.b16 %v464
    %v645 = vunpack.c.l.b16 %v465
    %v646 = vunpack.c.h.b16 %v465
    %v647 = vunpack.c.l.b16 %v466
    %v648 = vunpack.c.h.b16 %v466
    %v649 = vunpack.c.l.b16 %v467
    %v650 = vunpack.c.h.b16 %v467
    %v651 = vunpack.c.l.b16 %v468
    %v652 = vunpack.c.h.b16 %v468
    %v653 = vunpack.c.l.b16 %v469
    %v654 = vunpack.c.h.b16 %v469
    %v655 = vunpack.c.l.b16 %v470
    %v656 = vunpack.c.h.b16 %v470
    %v657 = vunpack.c.l.b16 %v471
    %v658 = vunpack.c.h.b16 %v471
    %v659 = vunpack.c.l.b16 %v472
    %v660 = vunpack.c.h.b16 %v472
    %v661 = vunpack.c.l.b16 %v473
    %v662 = vunpack.c.h.b16 %v473
    %v663 = vunpack.c.l.b16 %v474
    %v664 = vunpack.c.h.b16 %v474
    %v665 = vunpack.c.l.b16 %v475
    %v666 = vunpack.c.h.b16 %v475
    %v667 = vunpack.c.l.b16 %v476
    %v668 = vunpack.c.h.b16 %v476
    %v669 = vunpack.c.l.b16 %v477
    %v670 = vunpack.c.h.b16 %v477
    %v671 = vunpack.c.l.b16 %v478
    %v672 = vunpack.c.h.b16 %v478
    %v673 = vunpack.c.l.b16 %v479
    %v674 = vunpack.c.h.b16 %v479
    %v675 = vunpack.c.l.b16 %v480
    %v676 = vunpack.c.h.b16 %v480
    %v677 = vunpack.c.l.b16 %v481
    %v678 = vunpack.c.h.b16 %v481
    %v679 = vunpack.c.l.b16 %v482
    %v680 = vunpack.c.h.b16 %v482
    %v681 = vunpack.c.l.b16 %v483
    %v682 = vunpack.c.h.b16 %v483
    %v683 = vunpack.c.l.b16 %v484
    %v684 = vunpack.c.h.b16 %v484
    %v685 = vunpack.c.l.b16 %v485
    %v686 = vunpack.c.h.b16 %v485
    %v687 = vunpack.c.l.b16 %v486
    %v688 = vunpack.c.h.b16 %v486
    %v689 = vpack.c.b16 %v565, %v561
    %v690 = vpack.c.b16 %v566, %v562
    %v691 = vpack.c.b16 %v567, %v563
    %v692 = vpack.c.b16 %v568, %v564
    %v693 = vpack.c.b16 %v573, %v569
    %v694 = vpack.c.b16 %v574, %v570
    %v695 = vpack.c.b16 %v575, %v571
    %v696 = vpack.c.b16 %v576, %v572
    %v697 = vpack.c.b16 %v581, %v577
    %v698 = vpack.c.b16 %v582, %v578
    %v699 = vpack.c.b16 %v583, %v579
    %v700 = vpack.c.b16 %v584, %v580
    %v701 = vpack.c.b16 %v589, %v585
    %v702 = vpack.c.b16 %v590, %v586
    %v703 = vpack.c.b16 %v591, %v587
    %v704 = vpack.c.b16 %v592, %v588
    %v705 = vpack.c.b16 %v597, %v593
    %v706 = vpack.c.b16 %v598, %v594
    %v707 = vpack.c.b16 %v599, %v595
    %v708 = vpack.c.b16 %v600, %v596
    %v709 = vpack.c.b16 %v605, %v601
    %v710 = vpack.c.b16 %v606, %v602
    %v711 = vpack.c.b16 %v607, %v603
    %v712 = vpack.c.b16 %v608, %v604
    %v713 = vpack.c.b16 %v613, %v609
    %v714 = vpack.c.b16 %v614, %v610
    %v715 = vpack.c.b16 %v615, %v611
    %v716 = vpack.c.b16 %v616, %v612
    %v717 = vpack.c.b16 %v621, %v617
    %v718 = vpack.c.b16 %v622, %v618
    %v719 = vpack.c.b16 %v623, %v619
    %v720 = vpack.c.b16 %v624, %v620
    %v721 = vpack.c.b16 %v629, %v625
    %v722 = vpack.c.b16 %v630, %v626
    %v723 = vpack.c.b16 %v631, %v627
    %v724 = vpack.c.b16 %v632, %v628
    %v725 = vpack.c.b16 %v637, %v633
    %v726 = vpack.c.b16 %v638, %v634
    %v727 = vpack.c.b16 %v639, %v635
    %v728 = vpack.c.b16 %v640, %v636
    %v729 = vpack.c.b16 %v645, %v641
    %v730 = vpack.c.b16 %v646, %v642
    %v731 = vpack.c.b16 %v647, %v643
    %v732 = vpack.c.b16 %v648, %v644
    %v733 = vpack.c.b16 %v653, %v649
    %v734 = vpack.c.b16 %v654, %v650
    %v735 = vpack.c.b16 %v655, %v651
    %v736 = vpack.c.b16 %v656, %v652
    %v737 = vpack.c.b16 %v661, %v657
    %v738 = vpack.c.b16 %v662, %v658
    %v739 = vpack.c.b16 %v663, %v659
    %v740 = vpack.c.b16 %v664, %v660
    %v741 = vpack.c.b16 %v669, %v665
    %v742 = vpack.c.b16 %v670, %v666
    %v743 = vpack.c.b16 %v671, %v667
    %v744 = vpack.c.b16 %v672, %v668
    %v745 = vpack.c.b16 %v677, %v673
    %v746 = vpack.c.b16 %v678, %v674
    %v747 = vpack.c.b16 %v679, %v675
    %v748 = vpack.c.b16 %v680, %v676
    %v749 = vpack.c.b16 %v685, %v681
    %v750 = vpack.c.b16 %v686, %v682
    %v751 = vpack.c.b16 %v687, %v683
    %v752 = vpack.c.b16 %v688, %v684
    %817 = vmatpush.bf16.msra.mxu0 %v717
    %818 = vmatpush.bf16.msra.mxu0 %v713
    %819 = vmatpush.bf16.msra.mxu0 %v709
    %820 = vmatpush.bf16.msra.mxu0 %v705
    %821 = vmatpush.bf16.msra.mxu0 %v701
    %822 = vmatpush.bf16.msra.mxu0 %v697
    %823 = vmatpush.bf16.msra.mxu0 %v693
    %824 = vmatpush.bf16.msra.mxu0 %v689
    %825 = vmatmul.bf16.gmra.mxu0 %v407
    %v826 = vpop.f32.mrf.mxu0
    %v827 = vadd.f32 %v489, %v826
    %v828 = vpop.f32.mrf.mxu0
    %v829 = vadd.f32 %v489, %v828
    %830 = vmatmul.bf16.gmra.mxu0 %v409
    %v831 = vpop.f32.mrf.mxu0
    %v832 = vadd.f32 %v489, %v831
    %v833 = vpop.f32.mrf.mxu0
    %v834 = vadd.f32 %v489, %v833
    %835 = vmatmul.bf16.gmra.mxu0 %v411
    %v836 = vpop.f32.mrf.mxu0
    %v837 = vadd.f32 %v489, %v836
    %v838 = vpop.f32.mrf.mxu0
    %v839 = vadd.f32 %v489, %v838
    %840 = vmatmul.bf16.gmra.mxu0 %v413
    %v841 = vpop.f32.mrf.mxu0
    %v842 = vadd.f32 %v489, %v841
    %v843 = vpop.f32.mrf.mxu0
    %v844 = vadd.f32 %v489, %v843
    %845 = vmatmul.bf16.gmra.mxu0 %v415
    %v846 = vpop.f32.mrf.mxu0
    %v847 = vadd.f32 %v489, %v846
    %v848 = vpop.f32.mrf.mxu0
    %v849 = vadd.f32 %v489, %v848
    %850 = vmatmul.bf16.gmra.mxu0 %v417
    %v851 = vpop.f32.mrf.mxu0
    %v852 = vadd.f32 %v489, %v851
    %v853 = vpop.f32.mrf.mxu0
    %v854 = vadd.f32 %v489, %v853
    %855 = vmatmul.bf16.gmra.mxu0 %v419
    %v856 = vpop.f32.mrf.mxu0
    %v857 = vadd.f32 %v489, %v856
    %v858 = vpop.f32.mrf.mxu0
    %v859 = vadd.f32 %v489, %v858
    %860 = vmatmul.bf16.gmra.mxu0 %v421
    %v861 = vpop.f32.mrf.mxu0
    %v862 = vadd.f32 %v489, %v861
    %v863 = vpop.f32.mrf.mxu0
    %v864 = vadd.f32 %v489, %v863
    %865 = vdwg.mxu0
    %866 = vmatpush.bf16.msra.mxu0 %v749
    %867 = vmatpush.bf16.msra.mxu0 %v745
    %868 = vmatpush.bf16.msra.mxu0 %v741
    %869 = vmatpush.bf16.msra.mxu0 %v737
    %870 = vmatpush.bf16.msra.mxu0 %v733
    %871 = vmatpush.bf16.msra.mxu0 %v729
    %872 = vmatpush.bf16.msra.mxu0 %v725
    %873 = vmatpush.bf16.msra.mxu0 %v721
    %874 = vmatmul.bf16.gmra.mxu0 %v408
    %v875 = vpop.f32.mrf.mxu0
    %v876 = vadd.f32 %v827, %v875
    %v877 = vpop.f32.mrf.mxu0
    %v878 = vadd.f32 %v829, %v877
    %879 = vmatmul.bf16.gmra.mxu0 %v410
    %v880 = vpop.f32.mrf.mxu0
    %v881 = vadd.f32 %v832, %v880
    %v882 = vpop.f32.mrf.mxu0
    %v883 = vadd.f32 %v834, %v882
    %884 = vmatmul.bf16.gmra.mxu0 %v412
    %v885 = vpop.f32.mrf.mxu0
    %v886 = vadd.f32 %v837, %v885
    %v887 = vpop.f32.mrf.mxu0
    %v888 = vadd.f32 %v839, %v887
    %889 = vmatmul.bf16.gmra.mxu0 %v414
    %v890 = vpop.f32.mrf.mxu0
    %v891 = vadd.f32 %v842, %v890
    %v892 = vpop.f32.mrf.mxu0
    %v893 = vadd.f32 %v844, %v892
    %894 = vmatmul.bf16.gmra.mxu0 %v416
    %v895 = vpop.f32.mrf.mxu0
    %v896 = vadd.f32 %v847, %v895
    %v897 = vpop.f32.mrf.mxu0
    %v898 = vadd.f32 %v849, %v897
    %899 = vmatmul.bf16.gmra.mxu0 %v418
    %v900 = vpop.f32.mrf.mxu0
    %v901 = vadd.f32 %v852, %v900
    %v902 = vpop.f32.mrf.mxu0
    %v903 = vadd.f32 %v854, %v902
    %904 = vmatmul.bf16.gmra.mxu0 %v420
    %v905 = vpop.f32.mrf.mxu0
    %v906 = vadd.f32 %v857, %v905
    %v907 = vpop.f32.mrf.mxu0
    %v908 = vadd.f32 %v859, %v907
    %909 = vmatmul.bf16.gmra.mxu0 %v422
    %v910 = vpop.f32.mrf.mxu0
    %v911 = vadd.f32 %v862, %v910
    %v912 = vpop.f32.mrf.mxu0
    %v913 = vadd.f32 %v864, %v912
    %914 = vdwg.mxu0
    %915 = vmatpush.bf16.msra.mxu0 %v718
    %916 = vmatpush.bf16.msra.mxu0 %v714
    %917 = vmatpush.bf16.msra.mxu0 %v710
    %918 = vmatpush.bf16.msra.mxu0 %v706
    %919 = vmatpush.bf16.msra.mxu0 %v702
    %920 = vmatpush.bf16.msra.mxu0 %v698
    %921 = vmatpush.bf16.msra.mxu0 %v694
    %922 = vmatpush.bf16.msra.mxu0 %v690
    %923 = vmatmul.bf16.gmra.mxu0 %v407
    %v924 = vpop.f32.mrf.mxu0
    %v925 = vadd.f32 %v490, %v924
    %v926 = vpop.f32.mrf.mxu0
    %v927 = vadd.f32 %v490, %v926
    %928 = vmatmul.bf16.gmra.mxu0 %v409
    %v929 = vpop.f32.mrf.mxu0
    %v930 = vadd.f32 %v490, %v929
    %v931 = vpop.f32.mrf.mxu0
    %v932 = vadd.f32 %v490, %v931
    %933 = vmatmul.bf16.gmra.mxu0 %v411
    %v934 = vpop.f32.mrf.mxu0
    %v935 = vadd.f32 %v490, %v934
    %v936 = vpop.f32.mrf.mxu0
    %v937 = vadd.f32 %v490, %v936
    %938 = vmatmul.bf16.gmra.mxu0 %v413
    %v939 = vpop.f32.mrf.mxu0
    %v940 = vadd.f32 %v490, %v939
    %v941 = vpop.f32.mrf.mxu0
    %v942 = vadd.f32 %v490, %v941
    %943 = vmatmul.bf16.gmra.mxu0 %v415
    %v944 = vpop.f32.mrf.mxu0
    %v945 = vadd.f32 %v490, %v944
    %v946 = vpop.f32.mrf.mxu0
    %v947 = vadd.f32 %v490, %v946
    %948 = vmatmul.bf16.gmra.mxu0 %v417
    %v949 = vpop.f32.mrf.mxu0
    %v950 = vadd.f32 %v490, %v949
    %v951 = vpop.f32.mrf.mxu0
    %v952 = vadd.f32 %v490, %v951
    %953 = vmatmul.bf16.gmra.mxu0 %v419
    %v954 = vpop.f32.mrf.mxu0
    %v955 = vadd.f32 %v490, %v954
    %v956 = vpop.f32.mrf.mxu0
    %v957 = vadd.f32 %v490, %v956
    %958 = vmatmul.bf16.gmra.mxu0 %v421
    %v959 = vpop.f32.mrf.mxu0
    %v960 = vadd.f32 %v490, %v959
    %v961 = vpop.f32.mrf.mxu0
    %v962 = vadd.f32 %v490, %v961
    %963 = vdwg.mxu0
    %964 = vmatpush.bf16.msra.mxu0 %v750
    %965 = vmatpush.bf16.msra.mxu0 %v746
    %966 = vmatpush.bf16.msra.mxu0 %v742
    %967 = vmatpush.bf16.msra.mxu0 %v738
    %968 = vmatpush.bf16.msra.mxu0 %v734
    %969 = vmatpush.bf16.msra.mxu0 %v730
    %970 = vmatpush.bf16.msra.mxu0 %v726
    %971 = vmatpush.bf16.msra.mxu0 %v722
    %972 = vmatmul.bf16.gmra.mxu0 %v408
    %v973 = vpop.f32.mrf.mxu0
    %v974 = vadd.f32 %v925, %v973
    %v975 = vpop.f32.mrf.mxu0
    %v976 = vadd.f32 %v927, %v975
    %977 = vmatmul.bf16.gmra.mxu0 %v410
    %v978 = vpop.f32.mrf.mxu0
    %v979 = vadd.f32 %v930, %v978
    %v980 = vpop.f32.mrf.mxu0
    %v981 = vadd.f32 %v932, %v980
    %982 = vmatmul.bf16.gmra.mxu0 %v412
    %v983 = vpop.f32.mrf.mxu0
    %v984 = vadd.f32 %v935, %v983
    %v985 = vpop.f32.mrf.mxu0
    %v986 = vadd.f32 %v937, %v985
    %987 = vmatmul.bf16.gmra.mxu0 %v414
    %v988 = vpop.f32.mrf.mxu0
    %v989 = vadd.f32 %v940, %v988
    %v990 = vpop.f32.mrf.mxu0
    %v991 = vadd.f32 %v942, %v990
    %992 = vmatmul.bf16.gmra.mxu0 %v416
    %v993 = vpop.f32.mrf.mxu0
    %v994 = vadd.f32 %v945, %v993
    %v995 = vpop.f32.mrf.mxu0
    %v996 = vadd.f32 %v947, %v995
    %997 = vmatmul.bf16.gmra.mxu0 %v418
    %v998 = vpop.f32.mrf.mxu0
    %v999 = vadd.f32 %v950, %v998
    %v1000 = vpop.f32.mrf.mxu0
    %v1001 = vadd.f32 %v952, %v1000
    %1002 = vmatmul.bf16.gmra.mxu0 %v420
    %v1003 = vpop.f32.mrf.mxu0
    %v1004 = vadd.f32 %v955, %v1003
    %v1005 = vpop.f32.mrf.mxu0
    %v1006 = vadd.f32 %v957, %v1005
    %1007 = vmatmul.bf16.gmra.mxu0 %v422
    %v1008 = vpop.f32.mrf.mxu0
    %v1009 = vadd.f32 %v960, %v1008
    %v1010 = vpop.f32.mrf.mxu0
    %v1011 = vadd.f32 %v962, %v1010
    %1012 = vdwg.mxu0
    %1013 = vmatpush.bf16.msra.mxu0 %v719
    %1014 = vmatpush.bf16.msra.mxu0 %v715
    %1015 = vmatpush.bf16.msra.mxu0 %v711
    %1016 = vmatpush.bf16.msra.mxu0 %v707
    %1017 = vmatpush.bf16.msra.mxu0 %v703
    %1018 = vmatpush.bf16.msra.mxu0 %v699
    %1019 = vmatpush.bf16.msra.mxu0 %v695
    %1020 = vmatpush.bf16.msra.mxu0 %v691
    %1021 = vmatmul.bf16.gmra.mxu0 %v407
    %v1022 = vpop.f32.mrf.mxu0
    %v1023 = vadd.f32 %v491, %v1022
    %v1024 = vpop.f32.mrf.mxu0
    %v1025 = vadd.f32 %v491, %v1024
    %1026 = vmatmul.bf16.gmra.mxu0 %v409
    %v1027 = vpop.f32.mrf.mxu0
    %v1028 = vadd.f32 %v491, %v1027
    %v1029 = vpop.f32.mrf.mxu0
    %v1030 = vadd.f32 %v491, %v1029
    %1031 = vmatmul.bf16.gmra.mxu0 %v411
    %v1032 = vpop.f32.mrf.mxu0
    %v1033 = vadd.f32 %v491, %v1032
    %v1034 = vpop.f32.mrf.mxu0
    %v1035 = vadd.f32 %v491, %v1034
    %1036 = vmatmul.bf16.gmra.mxu0 %v413
    %v1037 = vpop.f32.mrf.mxu0
    %v1038 = vadd.f32 %v491, %v1037
    %v1039 = vpop.f32.mrf.mxu0
    %v1040 = vadd.f32 %v491, %v1039
    %1041 = vmatmul.bf16.gmra.mxu0 %v415
    %v1042 = vpop.f32.mrf.mxu0
    %v1043 = vadd.f32 %v491, %v1042
    %v1044 = vpop.f32.mrf.mxu0
    %v1045 = vadd.f32 %v491, %v1044
    %1046 = vmatmul.bf16.gmra.mxu0 %v417
    %v1047 = vpop.f32.mrf.mxu0
    %v1048 = vadd.f32 %v491, %v1047
    %v1049 = vpop.f32.mrf.mxu0
    %v1050 = vadd.f32 %v491, %v1049
    %1051 = vmatmul.bf16.gmra.mxu0 %v419
    %v1052 = vpop.f32.mrf.mxu0
    %v1053 = vadd.f32 %v491, %v1052
    %v1054 = vpop.f32.mrf.mxu0
    %v1055 = vadd.f32 %v491, %v1054
    %1056 = vmatmul.bf16.gmra.mxu0 %v421
    %v1057 = vpop.f32.mrf.mxu0
    %v1058 = vadd.f32 %v491, %v1057
    %v1059 = vpop.f32.mrf.mxu0
    %v1060 = vadd.f32 %v491, %v1059
    %1061 = vdwg.mxu0
    %1062 = vmatpush.bf16.msra.mxu0 %v751
    %1063 = vmatpush.bf16.msra.mxu0 %v747
    %1064 = vmatpush.bf16.msra.mxu0 %v743
    %1065 = vmatpush.bf16.msra.mxu0 %v739
    %1066 = vmatpush.bf16.msra.mxu0 %v735
    %1067 = vmatpush.bf16.msra.mxu0 %v731
    %1068 = vmatpush.bf16.msra.mxu0 %v727
    %1069 = vmatpush.bf16.msra.mxu0 %v723
    %1070 = vmatmul.bf16.gmra.mxu0 %v408
    %v1071 = vpop.f32.mrf.mxu0
    %v1072 = vadd.f32 %v1023, %v1071
    %v1073 = vpop.f32.mrf.mxu0
    %v1074 = vadd.f32 %v1025, %v1073
    %1075 = vmatmul.bf16.gmra.mxu0 %v410
    %v1076 = vpop.f32.mrf.mxu0
    %v1077 = vadd.f32 %v1028, %v1076
    %v1078 = vpop.f32.mrf.mxu0
    %v1079 = vadd.f32 %v1030, %v1078
    %1080 = vmatmul.bf16.gmra.mxu0 %v412
    %v1081 = vpop.f32.mrf.mxu0
    %v1082 = vadd.f32 %v1033, %v1081
    %v1083 = vpop.f32.mrf.mxu0
    %v1084 = vadd.f32 %v1035, %v1083
    %1085 = vmatmul.bf16.gmra.mxu0 %v414
    %v1086 = vpop.f32.mrf.mxu0
    %v1087 = vadd.f32 %v1038, %v1086
    %v1088 = vpop.f32.mrf.mxu0
    %v1089 = vadd.f32 %v1040, %v1088
    %1090 = vmatmul.bf16.gmra.mxu0 %v416
    %v1091 = vpop.f32.mrf.mxu0
    %v1092 = vadd.f32 %v1043, %v1091
    %v1093 = vpop.f32.mrf.mxu0
    %v1094 = vadd.f32 %v1045, %v1093
    %1095 = vmatmul.bf16.gmra.mxu0 %v418
    %v1096 = vpop.f32.mrf.mxu0
    %v1097 = vadd.f32 %v1048, %v1096
    %v1098 = vpop.f32.mrf.mxu0
    %v1099 = vadd.f32 %v1050, %v1098
    %1100 = vmatmul.bf16.gmra.mxu0 %v420
    %v1101 = vpop.f32.mrf.mxu0
    %v1102 = vadd.f32 %v1053, %v1101
    %v1103 = vpop.f32.mrf.mxu0
    %v1104 = vadd.f32 %v1055, %v1103
    %1105 = vmatmul.bf16.gmra.mxu0 %v422
    %v1106 = vpop.f32.mrf.mxu0
    %v1107 = vadd.f32 %v1058, %v1106
    %v1108 = vpop.f32.mrf.mxu0
    %v1109 = vadd.f32 %v1060, %v1108
    %1110 = vdwg.mxu0
    %1111 = vmatpush.bf16.msra.mxu0 %v720
    %1112 = vmatpush.bf16.msra.mxu0 %v716
    %1113 = vmatpush.bf16.msra.mxu0 %v712
    %1114 = vmatpush.bf16.msra.mxu0 %v708
    %1115 = vmatpush.bf16.msra.mxu0 %v704
    %1116 = vmatpush.bf16.msra.mxu0 %v700
    %1117 = vmatpush.bf16.msra.mxu0 %v696
    %1118 = vmatpush.bf16.msra.mxu0 %v692
    %1119 = vmatmul.bf16.gmra.mxu0 %v407
    %v1120 = vpop.f32.mrf.mxu0
    %v1121 = vadd.f32 %v492, %v1120
    %v1122 = vpop.f32.mrf.mxu0
    %v1123 = vadd.f32 %v492, %v1122
    %1124 = vmatmul.bf16.gmra.mxu0 %v409
    %v1125 = vpop.f32.mrf.mxu0
    %v1126 = vadd.f32 %v492, %v1125
    %v1127 = vpop.f32.mrf.mxu0
    %v1128 = vadd.f32 %v492, %v1127
    %1129 = vmatmul.bf16.gmra.mxu0 %v411
    %v1130 = vpop.f32.mrf.mxu0
    %v1131 = vadd.f32 %v492, %v1130
    %v1132 = vpop.f32.mrf.mxu0
    %v1133 = vadd.f32 %v492, %v1132
    %1134 = vmatmul.bf16.gmra.mxu0 %v413
    %v1135 = vpop.f32.mrf.mxu0
    %v1136 = vadd.f32 %v492, %v1135
    %v1137 = vpop.f32.mrf.mxu0
    %v1138 = vadd.f32 %v492, %v1137
    %1139 = vmatmul.bf16.gmra.mxu0 %v415
    %v1140 = vpop.f32.mrf.mxu0
    %v1141 = vadd.f32 %v492, %v1140
    %v1142 = vpop.f32.mrf.mxu0
    %v1143 = vadd.f32 %v492, %v1142
    %1144 = vmatmul.bf16.gmra.mxu0 %v417
    %v1145 = vpop.f32.mrf.mxu0
    %v1146 = vadd.f32 %v492, %v1145
    %v1147 = vpop.f32.mrf.mxu0
    %v1148 = vadd.f32 %v492, %v1147
    %1149 = vmatmul.bf16.gmra.mxu0 %v419
    %v1150 = vpop.f32.mrf.mxu0
    %v1151 = vadd.f32 %v492, %v1150
    %v1152 = vpop.f32.mrf.mxu0
    %v1153 = vadd.f32 %v492, %v1152
    %1154 = vmatmul.bf16.gmra.mxu0 %v421
    %v1155 = vpop.f32.mrf.mxu0
    %v1156 = vadd.f32 %v492, %v1155
    %v1157 = vpop.f32.mrf.mxu0
    %v1158 = vadd.f32 %v492, %v1157
    %1159 = vdwg.mxu0
    %1160 = vmatpush.bf16.msra.mxu0 %v752
    %1161 = vmatpush.bf16.msra.mxu0 %v748
    %1162 = vmatpush.bf16.msra.mxu0 %v744
    %1163 = vmatpush.bf16.msra.mxu0 %v740
    %1164 = vmatpush.bf16.msra.mxu0 %v736
    %1165 = vmatpush.bf16.msra.mxu0 %v732
    %1166 = vmatpush.bf16.msra.mxu0 %v728
    %1167 = vmatpush.bf16.msra.mxu0 %v724
    %1168 = vmatmul.bf16.gmra.mxu0 %v408
    %v1169 = vpop.f32.mrf.mxu0
    %v1170 = vadd.f32 %v1121, %v1169
    %v1171 = vpop.f32.mrf.mxu0
    %v1172 = vadd.f32 %v1123, %v1171
    %1173 = vmatmul.bf16.gmra.mxu0 %v410
    %v1174 = vpop.f32.mrf.mxu0
    %v1175 = vadd.f32 %v1126, %v1174
    %v1176 = vpop.f32.mrf.mxu0
    %v1177 = vadd.f32 %v1128, %v1176
    %1178 = vmatmul.bf16.gmra.mxu0 %v412
    %v1179 = vpop.f32.mrf.mxu0
    %v1180 = vadd.f32 %v1131, %v1179
    %v1181 = vpop.f32.mrf.mxu0
    %v1182 = vadd.f32 %v1133, %v1181
    %1183 = vmatmul.bf16.gmra.mxu0 %v414
    %v1184 = vpop.f32.mrf.mxu0
    %v1185 = vadd.f32 %v1136, %v1184
    %v1186 = vpop.f32.mrf.mxu0
    %v1187 = vadd.f32 %v1138, %v1186
    %1188 = vmatmul.bf16.gmra.mxu0 %v416
    %v1189 = vpop.f32.mrf.mxu0
    %v1190 = vadd.f32 %v1141, %v1189
    %v1191 = vpop.f32.mrf.mxu0
    %v1192 = vadd.f32 %v1143, %v1191
    %1193 = vmatmul.bf16.gmra.mxu0 %v418
    %v1194 = vpop.f32.mrf.mxu0
    %v1195 = vadd.f32 %v1146, %v1194
    %v1196 = vpop.f32.mrf.mxu0
    %v1197 = vadd.f32 %v1148, %v1196
    %1198 = vmatmul.bf16.gmra.mxu0 %v420
    %v1199 = vpop.f32.mrf.mxu0
    %v1200 = vadd.f32 %v1151, %v1199
    %v1201 = vpop.f32.mrf.mxu0
    %v1202 = vadd.f32 %v1153, %v1201
    %1203 = vmatmul.bf16.gmra.mxu0 %v422
    %v1204 = vpop.f32.mrf.mxu0
    %v1205 = vadd.f32 %v1156, %v1204
    %v1206 = vpop.f32.mrf.mxu0
    %v1207 = vadd.f32 %v1158, %v1206
    %1208 = vdwg.mxu0
    %v1209 = vmax.f32 %v876, 0.0
    %v1210 = vmax.f32 %v974, 0.0
    %v1211 = vmax.f32 %v1072, 0.0
    %v1212 = vmax.f32 %v1170, 0.0
    %v1213 = vmax.f32 %v878, 0.0
    %v1214 = vmax.f32 %v976, 0.0
    %v1215 = vmax.f32 %v1074, 0.0
    %v1216 = vmax.f32 %v1172, 0.0
    %v1217 = vmax.f32 %v881, 0.0
    %v1218 = vmax.f32 %v979, 0.0
    %v1219 = vmax.f32 %v1077, 0.0
    %v1220 = vmax.f32 %v1175, 0.0
    %v1221 = vmax.f32 %v883, 0.0
    %v1222 = vmax.f32 %v981, 0.0
    %v1223 = vmax.f32 %v1079, 0.0
    %v1224 = vmax.f32 %v1177, 0.0
    %v1225 = vmax.f32 %v886, 0.0
    %v1226 = vmax.f32 %v984, 0.0
    %v1227 = vmax.f32 %v1082, 0.0
    %v1228 = vmax.f32 %v1180, 0.0
    %v1229 = vmax.f32 %v888, 0.0
    %v1230 = vmax.f32 %v986, 0.0
    %v1231 = vmax.f32 %v1084, 0.0
    %v1232 = vmax.f32 %v1182, 0.0
    %v1233 = vmax.f32 %v891, 0.0
    %v1234 = vmax.f32 %v989, 0.0
    %v1235 = vmax.f32 %v1087, 0.0
    %v1236 = vmax.f32 %v1185, 0.0
    %v1237 = vmax.f32 %v893, 0.0
    %v1238 = vmax.f32 %v991, 0.0
    %v1239 = vmax.f32 %v1089, 0.0
    %v1240 = vmax.f32 %v1187, 0.0
    %v1241 = vmax.f32 %v896, 0.0
    %v1242 = vmax.f32 %v994, 0.0
    %v1243 = vmax.f32 %v1092, 0.0
    %v1244 = vmax.f32 %v1190, 0.0
    %v1245 = vmax.f32 %v898, 0.0
    %v1246 = vmax.f32 %v996, 0.0
    %v1247 = vmax.f32 %v1094, 0.0
    %v1248 = vmax.f32 %v1192, 0.0
    %v1249 = vmax.f32 %v901, 0.0
    %v1250 = vmax.f32 %v999, 0.0
    %v1251 = vmax.f32 %v1097, 0.0
    %v1252 = vmax.f32 %v1195, 0.0
    %v1253 = vmax.f32 %v903, 0.0
    %v1254 = vmax.f32 %v1001, 0.0
    %v1255 = vmax.f32 %v1099, 0.0
    %v1256 = vmax.f32 %v1197, 0.0
    %v1257 = vmax.f32 %v906, 0.0
    %v1258 = vmax.f32 %v1004, 0.0
    %v1259 = vmax.f32 %v1102, 0.0
    %v1260 = vmax.f32 %v1200, 0.0
    %v1261 = vmax.f32 %v908, 0.0
    %v1262 = vmax.f32 %v1006, 0.0
    %v1263 = vmax.f32 %v1104, 0.0
    %v1264 = vmax.f32 %v1202, 0.0
    %v1265 = vmax.f32 %v911, 0.0
    %v1266 = vmax.f32 %v1009, 0.0
    %v1267 = vmax.f32 %v1107, 0.0
    %v1268 = vmax.f32 %v1205, 0.0
    %v1269 = vmax.f32 %v913, 0.0
    %v1270 = vmax.f32 %v1011, 0.0
    %v1271 = vmax.f32 %v1109, 0.0
    %v1272 = vmax.f32 %v1207, 0.0
    %v1273 = vpack.c.bf16 %v1213, %v1209
    %v1274 = vpack.c.bf16 %v1214, %v1210
    %v1275 = vpack.c.bf16 %v1215, %v1211
    %v1276 = vpack.c.bf16 %v1216, %v1212
    %v1277 = vpack.c.bf16 %v1221, %v1217
    %v1278 = vpack.c.bf16 %v1222, %v1218
    %v1279 = vpack.c.bf16 %v1223, %v1219
    %v1280 = vpack.c.bf16 %v1224, %v1220
    %v1281 = vpack.c.bf16 %v1229, %v1225
    %v1282 = vpack.c.bf16 %v1230, %v1226
    %v1283 = vpack.c.bf16 %v1231, %v1227
    %v1284 = vpack.c.bf16 %v1232, %v1228
    %v1285 = vpack.c.bf16 %v1237, %v1233
    %v1286 = vpack.c.bf16 %v1238, %v1234
    %v1287 = vpack.c.bf16 %v1239, %v1235
    %v1288 = vpack.c.bf16 %v1240, %v1236
    %v1289 = vpack.c.bf16 %v1245, %v1241
    %v1290 = vpack.c.bf16 %v1246, %v1242
    %v1291 = vpack.c.bf16 %v1247, %v1243
    %v1292 = vpack.c.bf16 %v1248, %v1244
    %v1293 = vpack.c.bf16 %v1253, %v1249
    %v1294 = vpack.c.bf16 %v1254, %v1250
    %v1295 = vpack.c.bf16 %v1255, %v1251
    %v1296 = vpack.c.bf16 %v1256, %v1252
    %v1297 = vpack.c.bf16 %v1261, %v1257
    %v1298 = vpack.c.bf16 %v1262, %v1258
    %v1299 = vpack.c.bf16 %v1263, %v1259
    %v1300 = vpack.c.bf16 %v1264, %v1260
    %v1301 = vpack.c.bf16 %v1269, %v1265
    %v1302 = vpack.c.bf16 %v1270, %v1266
    %v1303 = vpack.c.bf16 %v1271, %v1267
    %v1304 = vpack.c.bf16 %v1272, %v1268
    %v1305 = vld [vmem:[#allocation8] sm:$0xf]
    %v1306 = vld [vmem:[#allocation8 + $0x4] sm:$0xf]
    %v1307 = vld [vmem:[#allocation8 + $0x8] sm:$0xf]
    %v1308 = vld [vmem:[#allocation8 + $0xc] sm:$0xf]
    %v1309 = vld [vmem:[#allocation8 + $0x10] sm:$0xf]
    %v1310 = vld [vmem:[#allocation8 + $0x14] sm:$0xf]
    %v1311 = vld [vmem:[#allocation8 + $0x18] sm:$0xf]
    %v1312 = vld [vmem:[#allocation8 + $0x1c] sm:$0xf]
    %v1313 = vld [vmem:[#allocation8 + $0x20] sm:$0xf]
    %v1314 = vld [vmem:[#allocation8 + $0x24] sm:$0xf]
    %v1315 = vld [vmem:[#allocation8 + $0x28] sm:$0xf]
    %v1316 = vld [vmem:[#allocation8 + $0x2c] sm:$0xf]
    %v1317 = vld [vmem:[#allocation8 + $0x30] sm:$0xf]
    %v1318 = vld [vmem:[#allocation8 + $0x34] sm:$0xf]
    %v1319 = vld [vmem:[#allocation8 + $0x38] sm:$0xf]
    %v1320 = vld [vmem:[#allocation8 + $0x3c] sm:$0xf]
    %v1321 = vld [vmem:[#allocation8 + $0x40] sm:$0xf]
    %v1322 = vld [vmem:[#allocation8 + $0x44] sm:$0xf]
    %v1323 = vld [vmem:[#allocation8 + $0x48] sm:$0xf]
    %v1324 = vld [vmem:[#allocation8 + $0x4c] sm:$0xf]
    %v1325 = vld [vmem:[#allocation8 + $0x50] sm:$0xf]
    %v1326 = vld [vmem:[#allocation8 + $0x54] sm:$0xf]
    %v1327 = vld [vmem:[#allocation8 + $0x58] sm:$0xf]
    %v1328 = vld [vmem:[#allocation8 + $0x5c] sm:$0xf]
    %v1329 = vld [vmem:[#allocation8 + $0x60] sm:$0xf]
    %v1330 = vld [vmem:[#allocation8 + $0x64] sm:$0xf]
    %v1331 = vld [vmem:[#allocation8 + $0x68] sm:$0xf]
    %v1332 = vld [vmem:[#allocation8 + $0x6c] sm:$0xf]
    %v1333 = vld [vmem:[#allocation8 + $0x70] sm:$0xf]
    %v1334 = vld [vmem:[#allocation8 + $0x74] sm:$0xf]
    %v1335 = vld [vmem:[#allocation8 + $0x78] sm:$0xf]
    %v1336 = vld [vmem:[#allocation8 + $0x7c] sm:$0xf]
    %v1337 = vld [vmem:[#allocation8 + $0x80] sm:$0xf]
    %v1338 = vld [vmem:[#allocation8 + $0x84] sm:$0xf]
    %v1339 = vld [vmem:[#allocation8 + $0x88] sm:$0xf]
    %v1340 = vld [vmem:[#allocation8 + $0x8c] sm:$0xf]
    %v1341 = vld [vmem:[#allocation8 + $0x90] sm:$0xf]
    %v1342 = vld [vmem:[#allocation8 + $0x94] sm:$0xf]
    %v1343 = vld [vmem:[#allocation8 + $0x98] sm:$0xf]
    %v1344 = vld [vmem:[#allocation8 + $0x9c] sm:$0xf]
    %v1345 = vld [vmem:[#allocation8 + $0xa0] sm:$0xf]
    %v1346 = vld [vmem:[#allocation8 + $0xa4] sm:$0xf]
    %v1347 = vld [vmem:[#allocation8 + $0xa8] sm:$0xf]
    %v1348 = vld [vmem:[#allocation8 + $0xac] sm:$0xf]
    %v1349 = vld [vmem:[#allocation8 + $0xb0] sm:$0xf]
    %v1350 = vld [vmem:[#allocation8 + $0xb4] sm:$0xf]
    %v1351 = vld [vmem:[#allocation8 + $0xb8] sm:$0xf]
    %v1352 = vld [vmem:[#allocation8 + $0xbc] sm:$0xf]
    %v1353 = vld [vmem:[#allocation8 + $0xc0] sm:$0xf]
    %v1354 = vld [vmem:[#allocation8 + $0xc4] sm:$0xf]
    %v1355 = vld [vmem:[#allocation8 + $0xc8] sm:$0xf]
    %v1356 = vld [vmem:[#allocation8 + $0xcc] sm:$0xf]
    %v1357 = vld [vmem:[#allocation8 + $0xd0] sm:$0xf]
    %v1358 = vld [vmem:[#allocation8 + $0xd4] sm:$0xf]
    %v1359 = vld [vmem:[#allocation8 + $0xd8] sm:$0xf]
    %v1360 = vld [vmem:[#allocation8 + $0xdc] sm:$0xf]
    %v1361 = vld [vmem:[#allocation8 + $0xe0] sm:$0xf]
    %v1362 = vld [vmem:[#allocation8 + $0xe4] sm:$0xf]
    %v1363 = vld [vmem:[#allocation8 + $0xe8] sm:$0xf]
    %v1364 = vld [vmem:[#allocation8 + $0xec] sm:$0xf]
    %v1365 = vld [vmem:[#allocation8 + $0xf0] sm:$0xf]
    %v1366 = vld [vmem:[#allocation8 + $0xf4] sm:$0xf]
    %v1367 = vld [vmem:[#allocation8 + $0xf8] sm:$0xf]
    %v1368 = vld [vmem:[#allocation8 + $0xfc] sm:$0xf]
    %v1369 = vld [vmem:[%s7] sm:$0x1]
    %v1371 = vperm.slane %v1369, 0
    %v1437 = vunpack.c.l.b16 %v1305
    %v1438 = vunpack.c.l.b16 %v1306
    %v1439 = vunpack.c.l.b16 %v1307
    %v1440 = vunpack.c.l.b16 %v1308
    %v1441 = vunpack.c.l.b16 %v1309
    %v1442 = vunpack.c.l.b16 %v1310
    %v1443 = vunpack.c.l.b16 %v1311
    %v1444 = vunpack.c.l.b16 %v1312
    %v1445 = vunpack.c.l.b16 %v1313
    %v1446 = vunpack.c.l.b16 %v1314
    %v1447 = vunpack.c.l.b16 %v1315
    %v1448 = vunpack.c.l.b16 %v1316
    %v1449 = vunpack.c.l.b16 %v1317
    %v1450 = vunpack.c.l.b16 %v1318
    %v1451 = vunpack.c.l.b16 %v1319
    %v1452 = vunpack.c.l.b16 %v1320
    %v1453 = vunpack.c.l.b16 %v1321
    %v1454 = vunpack.c.l.b16 %v1322
    %v1455 = vunpack.c.l.b16 %v1323
    %v1456 = vunpack.c.l.b16 %v1324
    %v1457 = vunpack.c.l.b16 %v1325
    %v1458 = vunpack.c.l.b16 %v1326
    %v1459 = vunpack.c.l.b16 %v1327
    %v1460 = vunpack.c.l.b16 %v1328
    %v1461 = vunpack.c.l.b16 %v1329
    %v1462 = vunpack.c.l.b16 %v1330
    %v1463 = vunpack.c.l.b16 %v1331
    %v1464 = vunpack.c.l.b16 %v1332
    %v1465 = vunpack.c.l.b16 %v1333
    %v1466 = vunpack.c.l.b16 %v1334
    %v1467 = vunpack.c.l.b16 %v1335
    %v1468 = vunpack.c.l.b16 %v1336
    %v1469 = vunpack.c.l.b16 %v1337
    %v1470 = vunpack.c.l.b16 %v1338
    %v1471 = vunpack.c.l.b16 %v1339
    %v1472 = vunpack.c.l.b16 %v1340
    %v1473 = vunpack.c.l.b16 %v1341
    %v1474 = vunpack.c.l.b16 %v1342
    %v1475 = vunpack.c.l.b16 %v1343
    %v1476 = vunpack.c.l.b16 %v1344
    %v1477 = vunpack.c.l.b16 %v1345
    %v1478 = vunpack.c.l.b16 %v1346
    %v1479 = vunpack.c.l.b16 %v1347
    %v1480 = vunpack.c.l.b16 %v1348
    %v1481 = vunpack.c.l.b16 %v1349
    %v1482 = vunpack.c.l.b16 %v1350
    %v1483 = vunpack.c.l.b16 %v1351
    %v1484 = vunpack.c.l.b16 %v1352
    %v1485 = vunpack.c.l.b16 %v1353
    %v1486 = vunpack.c.l.b16 %v1354
    %v1487 = vunpack.c.l.b16 %v1355
    %v1488 = vunpack.c.l.b16 %v1356
    %v1489 = vunpack.c.l.b16 %v1357
    %v1490 = vunpack.c.l.b16 %v1358
    %v1491 = vunpack.c.l.b16 %v1359
    %v1492 = vunpack.c.l.b16 %v1360
    %v1493 = vunpack.c.l.b16 %v1361
    %v1494 = vunpack.c.l.b16 %v1362
    %v1495 = vunpack.c.l.b16 %v1363
    %v1496 = vunpack.c.l.b16 %v1364
    %v1497 = vunpack.c.l.b16 %v1365
    %v1498 = vunpack.c.l.b16 %v1366
    %v1499 = vunpack.c.l.b16 %v1367
    %v1500 = vunpack.c.l.b16 %v1368
    %v1501 = vpack.c.b16 %v1438, %v1437
    %v1502 = vpack.c.b16 %v1440, %v1439
    %v1503 = vpack.c.b16 %v1442, %v1441
    %v1504 = vpack.c.b16 %v1444, %v1443
    %v1505 = vpack.c.b16 %v1446, %v1445
    %v1506 = vpack.c.b16 %v1448, %v1447
    %v1507 = vpack.c.b16 %v1450, %v1449
    %v1508 = vpack.c.b16 %v1452, %v1451
    %v1509 = vpack.c.b16 %v1454, %v1453
    %v1510 = vpack.c.b16 %v1456, %v1455
    %v1511 = vpack.c.b16 %v1458, %v1457
    %v1512 = vpack.c.b16 %v1460, %v1459
    %v1513 = vpack.c.b16 %v1462, %v1461
    %v1514 = vpack.c.b16 %v1464, %v1463
    %v1515 = vpack.c.b16 %v1466, %v1465
    %v1516 = vpack.c.b16 %v1468, %v1467
    %v1517 = vpack.c.b16 %v1470, %v1469
    %v1518 = vpack.c.b16 %v1472, %v1471
    %v1519 = vpack.c.b16 %v1474, %v1473
    %v1520 = vpack.c.b16 %v1476, %v1475
    %v1521 = vpack.c.b16 %v1478, %v1477
    %v1522 = vpack.c.b16 %v1480, %v1479
    %v1523 = vpack.c.b16 %v1482, %v1481
    %v1524 = vpack.c.b16 %v1484, %v1483
    %v1525 = vpack.c.b16 %v1486, %v1485
    %v1526 = vpack.c.b16 %v1488, %v1487
    %v1527 = vpack.c.b16 %v1490, %v1489
    %v1528 = vpack.c.b16 %v1492, %v1491
    %v1529 = vpack.c.b16 %v1494, %v1493
    %v1530 = vpack.c.b16 %v1496, %v1495
    %v1531 = vpack.c.b16 %v1498, %v1497
    %v1532 = vpack.c.b16 %v1500, %v1499
    %1565 = vmatpush.bf16.msra.mxu0 %v1508
    %1566 = vmatpush.bf16.msra.mxu0 %v1507
    %1567 = vmatpush.bf16.msra.mxu0 %v1506
    %1568 = vmatpush.bf16.msra.mxu0 %v1505
    %1569 = vmatpush.bf16.msra.mxu0 %v1504
    %1570 = vmatpush.bf16.msra.mxu0 %v1503
    %1571 = vmatpush.bf16.msra.mxu0 %v1502
    %1572 = vmatpush.bf16.msra.mxu0 %v1501
    %1573 = vmatmul.bf16.gmra.mxu0 %v1273
    %v1574 = vpop.f32.mrf.mxu0
    %v1575 = vadd.f32 %v1371, %v1574
    %v1576 = vpop.f32.mrf.mxu0
    %v1577 = vadd.f32 %v1371, %v1576
    %1578 = vmatmul.bf16.gmra.mxu0 %v1277
    %v1579 = vpop.f32.mrf.mxu0
    %v1580 = vadd.f32 %v1371, %v1579
    %v1581 = vpop.f32.mrf.mxu0
    %v1582 = vadd.f32 %v1371, %v1581
    %1583 = vmatmul.bf16.gmra.mxu0 %v1281
    %v1584 = vpop.f32.mrf.mxu0
    %v1585 = vadd.f32 %v1371, %v1584
    %v1586 = vpop.f32.mrf.mxu0
    %v1587 = vadd.f32 %v1371, %v1586
    %1588 = vmatmul.bf16.gmra.mxu0 %v1285
    %v1589 = vpop.f32.mrf.mxu0
    %v1590 = vadd.f32 %v1371, %v1589
    %v1591 = vpop.f32.mrf.mxu0
    %v1592 = vadd.f32 %v1371, %v1591
    %1593 = vmatmul.bf16.gmra.mxu0 %v1289
    %v1594 = vpop.f32.mrf.mxu0
    %v1595 = vadd.f32 %v1371, %v1594
    %v1596 = vpop.f32.mrf.mxu0
    %v1597 = vadd.f32 %v1371, %v1596
    %1598 = vmatmul.bf16.gmra.mxu0 %v1293
    %v1599 = vpop.f32.mrf.mxu0
    %v1600 = vadd.f32 %v1371, %v1599
    %v1601 = vpop.f32.mrf.mxu0
    %v1602 = vadd.f32 %v1371, %v1601
    %1603 = vmatmul.bf16.gmra.mxu0 %v1297
    %v1604 = vpop.f32.mrf.mxu0
    %v1605 = vadd.f32 %v1371, %v1604
    %v1606 = vpop.f32.mrf.mxu0
    %v1607 = vadd.f32 %v1371, %v1606
    %1608 = vmatmul.bf16.gmra.mxu0 %v1301
    %v1609 = vpop.f32.mrf.mxu0
    %v1610 = vadd.f32 %v1371, %v1609
    %v1611 = vpop.f32.mrf.mxu0
    %v1612 = vadd.f32 %v1371, %v1611
    %1613 = vdwg.mxu0
    %1614 = vmatpush.bf16.msra.mxu0 %v1516
    %1615 = vmatpush.bf16.msra.mxu0 %v1515
    %1616 = vmatpush.bf16.msra.mxu0 %v1514
    %1617 = vmatpush.bf16.msra.mxu0 %v1513
    %1618 = vmatpush.bf16.msra.mxu0 %v1512
    %1619 = vmatpush.bf16.msra.mxu0 %v1511
    %1620 = vmatpush.bf16.msra.mxu0 %v1510
    %1621 = vmatpush.bf16.msra.mxu0 %v1509
    %1622 = vmatmul.bf16.gmra.mxu0 %v1274
    %v1623 = vpop.f32.mrf.mxu0
    %v1624 = vadd.f32 %v1575, %v1623
    %v1625 = vpop.f32.mrf.mxu0
    %v1626 = vadd.f32 %v1577, %v1625
    %1627 = vmatmul.bf16.gmra.mxu0 %v1278
    %v1628 = vpop.f32.mrf.mxu0
    %v1629 = vadd.f32 %v1580, %v1628
    %v1630 = vpop.f32.mrf.mxu0
    %v1631 = vadd.f32 %v1582, %v1630
    %1632 = vmatmul.bf16.gmra.mxu0 %v1282
    %v1633 = vpop.f32.mrf.mxu0
    %v1634 = vadd.f32 %v1585, %v1633
    %v1635 = vpop.f32.mrf.mxu0
    %v1636 = vadd.f32 %v1587, %v1635
    %1637 = vmatmul.bf16.gmra.mxu0 %v1286
    %v1638 = vpop.f32.mrf.mxu0
    %v1639 = vadd.f32 %v1590, %v1638
    %v1640 = vpop.f32.mrf.mxu0
    %v1641 = vadd.f32 %v1592, %v1640
    %1642 = vmatmul.bf16.gmra.mxu0 %v1290
    %v1643 = vpop.f32.mrf.mxu0
    %v1644 = vadd.f32 %v1595, %v1643
    %v1645 = vpop.f32.mrf.mxu0
    %v1646 = vadd.f32 %v1597, %v1645
    %1647 = vmatmul.bf16.gmra.mxu0 %v1294
    %v1648 = vpop.f32.mrf.mxu0
    %v1649 = vadd.f32 %v1600, %v1648
    %v1650 = vpop.f32.mrf.mxu0
    %v1651 = vadd.f32 %v1602, %v1650
    %1652 = vmatmul.bf16.gmra.mxu0 %v1298
    %v1653 = vpop.f32.mrf.mxu0
    %v1654 = vadd.f32 %v1605, %v1653
    %v1655 = vpop.f32.mrf.mxu0
    %v1656 = vadd.f32 %v1607, %v1655
    %1657 = vmatmul.bf16.gmra.mxu0 %v1302
    %v1658 = vpop.f32.mrf.mxu0
    %v1659 = vadd.f32 %v1610, %v1658
    %v1660 = vpop.f32.mrf.mxu0
    %v1661 = vadd.f32 %v1612, %v1660
    %1662 = vdwg.mxu0
    %1663 = vmatpush.bf16.msra.mxu0 %v1524
    %1664 = vmatpush.bf16.msra.mxu0 %v1523
    %1665 = vmatpush.bf16.msra.mxu0 %v1522
    %1666 = vmatpush.bf16.msra.mxu0 %v1521
    %1667 = vmatpush.bf16.msra.mxu0 %v1520
    %1668 = vmatpush.bf16.msra.mxu0 %v1519
    %1669 = vmatpush.bf16.msra.mxu0 %v1518
    %1670 = vmatpush.bf16.msra.mxu0 %v1517
    %1671 = vmatmul.bf16.gmra.mxu0 %v1275
    %v1672 = vpop.f32.mrf.mxu0
    %v1673 = vadd.f32 %v1624, %v1672
    %v1674 = vpop.f32.mrf.mxu0
    %v1675 = vadd.f32 %v1626, %v1674
    %1676 = vmatmul.bf16.gmra.mxu0 %v1279
    %v1677 = vpop.f32.mrf.mxu0
    %v1678 = vadd.f32 %v1629, %v1677
    %v1679 = vpop.f32.mrf.mxu0
    %v1680 = vadd.f32 %v1631, %v1679
    %1681 = vmatmul.bf16.gmra.mxu0 %v1283
    %v1682 = vpop.f32.mrf.mxu0
    %v1683 = vadd.f32 %v1634, %v1682
    %v1684 = vpop.f32.mrf.mxu0
    %v1685 = vadd.f32 %v1636, %v1684
    %1686 = vmatmul.bf16.gmra.mxu0 %v1287
    %v1687 = vpop.f32.mrf.mxu0
    %v1688 = vadd.f32 %v1639, %v1687
    %v1689 = vpop.f32.mrf.mxu0
    %v1690 = vadd.f32 %v1641, %v1689
    %1691 = vmatmul.bf16.gmra.mxu0 %v1291
    %v1692 = vpop.f32.mrf.mxu0
    %v1693 = vadd.f32 %v1644, %v1692
    %v1694 = vpop.f32.mrf.mxu0
    %v1695 = vadd.f32 %v1646, %v1694
    %1696 = vmatmul.bf16.gmra.mxu0 %v1295
    %v1697 = vpop.f32.mrf.mxu0
    %v1698 = vadd.f32 %v1649, %v1697
    %v1699 = vpop.f32.mrf.mxu0
    %v1700 = vadd.f32 %v1651, %v1699
    %1701 = vmatmul.bf16.gmra.mxu0 %v1299
    %v1702 = vpop.f32.mrf.mxu0
    %v1703 = vadd.f32 %v1654, %v1702
    %v1704 = vpop.f32.mrf.mxu0
    %v1705 = vadd.f32 %v1656, %v1704
    %1706 = vmatmul.bf16.gmra.mxu0 %v1303
    %v1707 = vpop.f32.mrf.mxu0
    %v1708 = vadd.f32 %v1659, %v1707
    %v1709 = vpop.f32.mrf.mxu0
    %v1710 = vadd.f32 %v1661, %v1709
    %1711 = vdwg.mxu0
    %1712 = vmatpush.bf16.msra.mxu0 %v1532
    %1713 = vmatpush.bf16.msra.mxu0 %v1531
    %1714 = vmatpush.bf16.msra.mxu0 %v1530
    %1715 = vmatpush.bf16.msra.mxu0 %v1529
    %1716 = vmatpush.bf16.msra.mxu0 %v1528
    %1717 = vmatpush.bf16.msra.mxu0 %v1527
    %1718 = vmatpush.bf16.msra.mxu0 %v1526
    %1719 = vmatpush.bf16.msra.mxu0 %v1525
    %1720 = vmatmul.bf16.gmra.mxu0 %v1276
    %v1721 = vpop.f32.mrf.mxu0
    %v1722 = vadd.f32 %v1673, %v1721
    %v1723 = vpop.f32.mrf.mxu0
    %v1724 = vadd.f32 %v1675, %v1723
    %1725 = vmatmul.bf16.gmra.mxu0 %v1280
    %v1726 = vpop.f32.mrf.mxu0
    %v1727 = vadd.f32 %v1678, %v1726
    %v1728 = vpop.f32.mrf.mxu0
    %v1729 = vadd.f32 %v1680, %v1728
    %1730 = vmatmul.bf16.gmra.mxu0 %v1284
    %v1731 = vpop.f32.mrf.mxu0
    %v1732 = vadd.f32 %v1683, %v1731
    %v1733 = vpop.f32.mrf.mxu0
    %v1734 = vadd.f32 %v1685, %v1733
    %1735 = vmatmul.bf16.gmra.mxu0 %v1288
    %v1736 = vpop.f32.mrf.mxu0
    %v1737 = vadd.f32 %v1688, %v1736
    %v1738 = vpop.f32.mrf.mxu0
    %v1739 = vadd.f32 %v1690, %v1738
    %1740 = vmatmul.bf16.gmra.mxu0 %v1292
    %v1741 = vpop.f32.mrf.mxu0
    %v1742 = vadd.f32 %v1693, %v1741
    %v1743 = vpop.f32.mrf.mxu0
    %v1744 = vadd.f32 %v1695, %v1743
    %1745 = vmatmul.bf16.gmra.mxu0 %v1296
    %v1746 = vpop.f32.mrf.mxu0
    %v1747 = vadd.f32 %v1698, %v1746
    %v1748 = vpop.f32.mrf.mxu0
    %v1749 = vadd.f32 %v1700, %v1748
    %1750 = vmatmul.bf16.gmra.mxu0 %v1300
    %v1751 = vpop.f32.mrf.mxu0
    %v1752 = vadd.f32 %v1703, %v1751
    %v1753 = vpop.f32.mrf.mxu0
    %v1754 = vadd.f32 %v1705, %v1753
    %1755 = vmatmul.bf16.gmra.mxu0 %v1304
    %v1756 = vpop.f32.mrf.mxu0
    %v1757 = vadd.f32 %v1708, %v1756
    %v1758 = vpop.f32.mrf.mxu0
    %v1759 = vadd.f32 %v1710, %v1758
    %1760 = vdwg.mxu0
    %v1761 = vmax.f32 %v1722, 0.0
    %v1762 = vmax.f32 %v1724, 0.0
    %v1763 = vmax.f32 %v1727, 0.0
    %v1764 = vmax.f32 %v1729, 0.0
    %v1765 = vmax.f32 %v1732, 0.0
    %v1766 = vmax.f32 %v1734, 0.0
    %v1767 = vmax.f32 %v1737, 0.0
    %v1768 = vmax.f32 %v1739, 0.0
    %v1769 = vmax.f32 %v1742, 0.0
    %v1770 = vmax.f32 %v1744, 0.0
    %v1771 = vmax.f32 %v1747, 0.0
    %v1772 = vmax.f32 %v1749, 0.0
    %v1773 = vmax.f32 %v1752, 0.0
    %v1774 = vmax.f32 %v1754, 0.0
    %v1775 = vmax.f32 %v1757, 0.0
    %v1776 = vmax.f32 %v1759, 0.0
    %v1777 = vpack.c.bf16 %v1762, %v1761
    %v1778 = vpack.c.bf16 %v1764, %v1763
    %v1779 = vpack.c.bf16 %v1766, %v1765
    %v1780 = vpack.c.bf16 %v1768, %v1767
    %v1781 = vpack.c.bf16 %v1770, %v1769
    %v1782 = vpack.c.bf16 %v1772, %v1771
    %v1783 = vpack.c.bf16 %v1774, %v1773
    %v1784 = vpack.c.bf16 %v1776, %v1775
    %v1785 = vld [vmem:[%s8] sm:$0xf]
    %v1786 = vld [vmem:[%s8 + $0x4] sm:$0xf]
    %v1787 = vld [vmem:[%s8 + $0x8] sm:$0xf]
    %v1788 = vld [vmem:[%s8 + $0xc] sm:$0xf]
    %v1789 = vld [vmem:[%s8 + $0x10] sm:$0xf]
    %v1790 = vld [vmem:[%s8 + $0x14] sm:$0xf]
    %v1791 = vld [vmem:[%s8 + $0x18] sm:$0xf]
    %v1792 = vld [vmem:[%s8 + $0x1c] sm:$0xf]
    %v1793 = vld [vmem:[%s8 + $0x20] sm:$0xf]
    %v1794 = vld [vmem:[%s8 + $0x24] sm:$0xf]
    %v1795 = vld [vmem:[%s8 + $0x28] sm:$0xf]
    %v1796 = vld [vmem:[%s8 + $0x2c] sm:$0xf]
    %v1797 = vld [vmem:[%s8 + $0x30] sm:$0xf]
    %v1798 = vld [vmem:[%s8 + $0x34] sm:$0xf]
    %v1799 = vld [vmem:[%s8 + $0x38] sm:$0xf]
    %v1800 = vld [vmem:[%s8 + $0x3c] sm:$0xf]
    %v1801 = vld [vmem:[%s9] sm:$0x1]
    %v1803 = vperm.slane %v1801, 0
    %v1821 = vunpack.c.l.b16 %v1785
    %v1822 = vunpack.c.l.b16 %v1786
    %v1823 = vunpack.c.l.b16 %v1787
    %v1824 = vunpack.c.l.b16 %v1788
    %v1825 = vunpack.c.l.b16 %v1789
    %v1826 = vunpack.c.l.b16 %v1790
    %v1827 = vunpack.c.l.b16 %v1791
    %v1828 = vunpack.c.l.b16 %v1792
    %v1829 = vunpack.c.l.b16 %v1793
    %v1830 = vunpack.c.l.b16 %v1794
    %v1831 = vunpack.c.l.b16 %v1795
    %v1832 = vunpack.c.l.b16 %v1796
    %v1833 = vunpack.c.l.b16 %v1797
    %v1834 = vunpack.c.l.b16 %v1798
    %v1835 = vunpack.c.l.b16 %v1799
    %v1836 = vunpack.c.l.b16 %v1800
    %v1837 = vpack.c.b16 %v1822, %v1821
    %v1838 = vpack.c.b16 %v1824, %v1823
    %v1839 = vpack.c.b16 %v1826, %v1825
    %v1840 = vpack.c.b16 %v1828, %v1827
    %v1841 = vpack.c.b16 %v1830, %v1829
    %v1842 = vpack.c.b16 %v1832, %v1831
    %v1843 = vpack.c.b16 %v1834, %v1833
    %v1844 = vpack.c.b16 %v1836, %v1835
    %1853 = vmatpush.bf16.msra.mxu0 %v1844
    %1854 = vmatpush.bf16.msra.mxu0 %v1843
    %1855 = vmatpush.bf16.msra.mxu0 %v1842
    %1856 = vmatpush.bf16.msra.mxu0 %v1841
    %1857 = vmatpush.bf16.msra.mxu0 %v1840
    %1858 = vmatpush.bf16.msra.mxu0 %v1839
    %1859 = vmatpush.bf16.msra.mxu0 %v1838
    %1860 = vmatpush.bf16.msra.mxu0 %v1837
    %1861 = vmatmul.bf16.gmra.mxu0 %v1777
    %v1862 = vpop.f32.mrf.mxu0
    %v1863 = vadd.f32 %v1803, %v1862
    %v1864 = vpop.f32.mrf.mxu0
    %v1865 = vadd.f32 %v1803, %v1864
    %1866 = vmatmul.bf16.gmra.mxu0 %v1778
    %v1867 = vpop.f32.mrf.mxu0
    %v1868 = vadd.f32 %v1803, %v1867
    %v1869 = vpop.f32.mrf.mxu0
    %v1870 = vadd.f32 %v1803, %v1869
    %1871 = vmatmul.bf16.gmra.mxu0 %v1779
    %v1872 = vpop.f32.mrf.mxu0
    %v1873 = vadd.f32 %v1803, %v1872
    %v1874 = vpop.f32.mrf.mxu0
    %v1875 = vadd.f32 %v1803, %v1874
    %1876 = vmatmul.bf16.gmra.mxu0 %v1780
    %v1877 = vpop.f32.mrf.mxu0
    %v1878 = vadd.f32 %v1803, %v1877
    %v1879 = vpop.f32.mrf.mxu0
    %v1880 = vadd.f32 %v1803, %v1879
    %1881 = vmatmul.bf16.gmra.mxu0 %v1781
    %v1882 = vpop.f32.mrf.mxu0
    %v1883 = vadd.f32 %v1803, %v1882
    %v1884 = vpop.f32.mrf.mxu0
    %v1885 = vadd.f32 %v1803, %v1884
    %1886 = vmatmul.bf16.gmra.mxu0 %v1782
    %v1887 = vpop.f32.mrf.mxu0
    %v1888 = vadd.f32 %v1803, %v1887
    %v1889 = vpop.f32.mrf.mxu0
    %v1890 = vadd.f32 %v1803, %v1889
    %1891 = vmatmul.bf16.gmra.mxu0 %v1783
    %v1892 = vpop.f32.mrf.mxu0
    %v1893 = vadd.f32 %v1803, %v1892
    %v1894 = vpop.f32.mrf.mxu0
    %v1895 = vadd.f32 %v1803, %v1894
    %1896 = vmatmul.bf16.gmra.mxu0 %v1784
    %v1897 = vpop.f32.mrf.mxu0
    %v1898 = vadd.f32 %v1803, %v1897
    %v1899 = vpop.f32.mrf.mxu0
    %v1900 = vadd.f32 %v1803, %v1899
    %1901 = vdwg.mxu0
    %v1902 = vsub.f32 %v1863, %v1883
    %v1903 = vsub.f32 %v1865, %v1885
    %v1904 = vsub.f32 %v1868, %v1888
    %v1905 = vsub.f32 %v1870, %v1890
    %v1906 = vsub.f32 %v1873, %v1893
    %v1907 = vsub.f32 %v1875, %v1895
    %v1908 = vsub.f32 %v1878, %v1898
    %v1909 = vsub.f32 %v1880, %v1900
    %v1910 = vpack.c.bf16 %v1903, %v1902
    %v1911 = vpack.c.bf16 %v1905, %v1904
    %v1912 = vpack.c.bf16 %v1907, %v1906
    %v1913 = vpack.c.bf16 %v1909, %v1908
    %v1914 = vld [vmem:[%s10] sm:$0xf]
    %v1915 = vld [vmem:[%s10 + $0x4] sm:$0xf]
    %v1916 = vld [vmem:[%s10 + $0x8] sm:$0xf]
    %v1917 = vld [vmem:[%s10 + $0xc] sm:$0xf]
    %v1918 = vld [vmem:[%s10 + $0x10] sm:$0xf]
    %v1919 = vld [vmem:[%s10 + $0x14] sm:$0xf]
    %v1920 = vld [vmem:[%s10 + $0x18] sm:$0xf]
    %v1921 = vld [vmem:[%s10 + $0x1c] sm:$0xf]
    %v1922 = vld [vmem:[%s11] sm:$0x1]
    %v1924 = vperm.slane %v1922, 0
    %v1934 = vunpack.c.l.b16 %v1914
    %v1935 = vunpack.c.l.b16 %v1915
    %v1936 = vunpack.c.l.b16 %v1916
    %v1937 = vunpack.c.l.b16 %v1917
    %v1938 = vunpack.c.l.b16 %v1918
    %v1939 = vunpack.c.l.b16 %v1919
    %v1940 = vunpack.c.l.b16 %v1920
    %v1941 = vunpack.c.l.b16 %v1921
    %v1942 = vpack.c.b16 %v1935, %v1934
    %v1943 = vpack.c.b16 %v1937, %v1936
    %v1944 = vpack.c.b16 %v1939, %v1938
    %v1945 = vpack.c.b16 %v1941, %v1940
    %vm1950 = vcmask 523264
    %v1952 = vsel %vm1950, %v1910, 0
    %v1955 = vsel %vm1950, %v1911, 0
    %v1958 = vsel %vm1950, %v1912, 0
    %v1961 = vsel %vm1950, %v1913, 0
    %1963 = vmatpush.bf16.msra.mxu0 0
    %1964 = vmatpush.bf16.msra.mxu0 0
    %1965 = vmatpush.bf16.msra.mxu0 0
    %1966 = vmatpush.bf16.msra.mxu0 0
    %1967 = vmatpush.bf16.msra.mxu0 %v1945
    %1968 = vmatpush.bf16.msra.mxu0 %v1944
    %1969 = vmatpush.bf16.msra.mxu0 %v1943
    %1970 = vmatpush.bf16.msra.mxu0 %v1942
    %1971 = vmatmul.bf16.gmra.mxu0 %v1952
    %v1972 = vpop.f32.mrf.mxu0
    %v1973 = vadd.f32 %v1924, %v1972
    %v1974 = vpop.f32.mrf.mxu0
    %v1975 = vadd.f32 %v1924, %v1974
    %1976 = vmatmul.bf16.gmra.mxu0 %v1955
    %v1977 = vpop.f32.mrf.mxu0
    %v1978 = vadd.f32 %v1924, %v1977
    %v1979 = vpop.f32.mrf.mxu0
    %v1980 = vadd.f32 %v1924, %v1979
    %1981 = vmatmul.bf16.gmra.mxu0 %v1958
    %v1982 = vpop.f32.mrf.mxu0
    %v1983 = vadd.f32 %v1924, %v1982
    %v1984 = vpop.f32.mrf.mxu0
    %v1985 = vadd.f32 %v1924, %v1984
    %1986 = vmatmul.bf16.gmra.mxu0 %v1961
    %v1987 = vpop.f32.mrf.mxu0
    %v1988 = vadd.f32 %v1924, %v1987
    %v1989 = vpop.f32.mrf.mxu0
    %v1990 = vadd.f32 %v1924, %v1989
    %1991 = vdwg.mxu0
    %v1992 = vmax.f32 %v1973, 0.0
    %v1993 = vmax.f32 %v1975, 0.0
    %v1994 = vmax.f32 %v1978, 0.0
    %v1995 = vmax.f32 %v1980, 0.0
    %v1996 = vmax.f32 %v1983, 0.0
    %v1997 = vmax.f32 %v1985, 0.0
    %v1998 = vmax.f32 %v1988, 0.0
    %v1999 = vmax.f32 %v1990, 0.0
    %v2000 = vld [vmem:[%s12] sm:$0x1]
    %v2002 = vperm.slane %v2000, 0
    %v2004 = vmul.f32 %v1992, %v2002
    %v2005 = vmul.f32 %v1993, %v2002
    %v2006 = vmul.f32 %v1994, %v2002
    %v2007 = vmul.f32 %v1995, %v2002
    %v2008 = vmul.f32 %v1996, %v2002
    %v2009 = vmul.f32 %v1997, %v2002
    %v2010 = vmul.f32 %v1998, %v2002
    %v2011 = vmul.f32 %v1999, %v2002
    %v2012 = vsel %vm1950, %v2004, 0.0
    %2013 = vadd.xlane.f32.xlu0 %v2012
    %v2014 = vpop.xlane.xlu0 %2013
    %v2015 = vsel %vm1950, %v2005, 0.0
    %2016 = vadd.xlane.f32.xlu0 %v2015
    %v2017 = vpop.xlane.xlu0 %2016
    %v2018 = vsel %vm1950, %v2006, 0.0
    %2019 = vadd.xlane.f32.xlu0 %v2018
    %v2020 = vpop.xlane.xlu0 %2019
    %v2021 = vsel %vm1950, %v2007, 0.0
    %2022 = vadd.xlane.f32.xlu0 %v2021
    %v2023 = vpop.xlane.xlu0 %2022
    %v2024 = vsel %vm1950, %v2008, 0.0
    %2025 = vadd.xlane.f32.xlu0 %v2024
    %v2026 = vpop.xlane.xlu0 %2025
    %v2027 = vsel %vm1950, %v2009, 0.0
    %2028 = vadd.xlane.f32.xlu0 %v2027
    %v2029 = vpop.xlane.xlu0 %2028
    %v2030 = vsel %vm1950, %v2010, 0.0
    %2031 = vadd.xlane.f32.xlu0 %v2030
    %v2032 = vpop.xlane.xlu0 %2031
    %v2033 = vsel %vm1950, %v2011, 0.0
    %2034 = vadd.xlane.f32.xlu0 %v2033
    %v2035 = vpop.xlane.xlu0 %2034
    %v2036 = vld [vmem:[#allocation2] sm:$0x1]
    %v2038 = vperm.slane %v2036, 0
    %v2040 = vadd.f32 %v2014, %v2038
    %v2041 = vadd.f32 %v2017, %v2038
    %v2042 = vadd.f32 %v2020, %v2038
    %v2043 = vadd.f32 %v2023, %v2038
    %v2044 = vadd.f32 %v2026, %v2038
    %v2045 = vadd.f32 %v2029, %v2038
    %v2046 = vadd.f32 %v2032, %v2038
    %v2047 = vadd.f32 %v2035, %v2038
    %vm2048 = vcmask 7168
    %2049 = vst.msk [vmem:[%s14] sm:$0xff] %vm2048, %v2040
    %2050 = vst.msk [vmem:[%s14 + $0x8] sm:$0xff] %vm2048, %v2041
    %2051 = vst.msk [vmem:[%s14 + $0x10] sm:$0xff] %vm2048, %v2042
    %2052 = vst.msk [vmem:[%s14 + $0x18] sm:$0xff] %vm2048, %v2043
    %2053 = vst.msk [vmem:[%s14 + $0x20] sm:$0xff] %vm2048, %v2044
    %2054 = vst.msk [vmem:[%s14 + $0x28] sm:$0xff] %vm2048, %v2045
    %2055 = vst.msk [vmem:[%s14 + $0x30] sm:$0xff] %vm2048, %v2046
    %2056 = vst.msk [vmem:[%s14 + $0x38] sm:$0xff] %vm2048, %v2047
    // Predicated region
    $region74: #{tpu_custom_call.1} parent=1 // pred_check
      _
    $region75: #{tpu_custom_call.1} parent=1 // pred_check_branch
      %2058 = sbr.rel (0) target = $region77
    $region76: #{tpu_custom_call.1} parent=1 // pred_region
      _
    $region77: #{tpu_custom_call.1} parent=1 // pred_fallthru
      _
    // Predicated region
    $region78: #{tpu_custom_call.1} parent=1 // pred_check
      _
    $region79: #{tpu_custom_call.1} parent=1 // pred_check_branch
      %2060 = sbr.rel (0) target = $region81
    $region80: #{tpu_custom_call.1} parent=1 // pred_region
      _
    $region81: #{tpu_custom_call.1} parent=1 // pred_fallthru
      _
    %2061 = vsyncpa [#allocation4], 1
    %2062 = vsyncpa [#allocation6], 1
    %2063 = vsyncpa [#allocation9], 1

</llo_original>
